<compile_context>
chip_gen: v5e
topology: v5e:2x2
jax: 0.10.0
libtpu: 0.0.40
codegen_flags: <defaults>
</compile_context>

<pallas_src>
import functools

import jax
import jax.numpy as jnp
from jax.experimental import pallas as pl
from jax.experimental.pallas import tpu as pltpu

BN_EPS = 1e-5
DROP_P = 0.25
LANE = 128


def _round_up(n, m):
    return ((n + m - 1) // m) * m


# ----------------------------------------------------------------------------
# Kernels
# ----------------------------------------------------------------------------
def _mlp_eval_kernel(x_ref, w1_ref, b1_ref, w2_ref, b2_ref, out_ref):
    # fc1 with eval BatchNorm pre-folded into w1/b1 host-side.
    h = jnp.dot(x_ref[...], w1_ref[...], preferred_element_type=jnp.float32)
    h = h + b1_ref[...]
    # ELU (alpha = 1).  exp(x)-1 (expm1 lowering not guaranteed on Mosaic).
    a = jnp.where(h > 0, h, jnp.exp(h) - 1.0)
    # fc2 into a 128-lane padded output (lane-dense, unmasked stores).
    out_ref[...] = (jnp.dot(a, w2_ref[...], preferred_element_type=jnp.float32)
                    + b2_ref[...])


def _mlp_train_kernel(x_ref, w1_ref, b1_ref, gamma_ref, beta_ref,
                      w2_ref, b2_ref, mask_ref, out_ref, mean_ref, var_ref):
    # fc1
    h = jnp.dot(x_ref[...], w1_ref[...], preferred_element_type=jnp.float32)
    h = h + b1_ref[...]
    # BatchNorm1d (train: biased batch statistics over the whole batch).
    mean = jnp.mean(h, axis=0, keepdims=True)
    centered = h - mean
    var = jnp.mean(centered * centered, axis=0, keepdims=True)
    hn = centered * jax.lax.rsqrt(var + BN_EPS) * gamma_ref[...] + beta_ref[...]
    # ELU (alpha = 1)
    a = jnp.where(hn > 0, hn, jnp.exp(hn) - 1.0)
    # Dropout(p=0.25): pre-scaled keep mask supplied by the wrapper.
    a = a * mask_ref[...]
    # fc2 (128-lane padded output)
    out_ref[...] = (jnp.dot(a, w2_ref[...], preferred_element_type=jnp.float32)
                    + b2_ref[...])
    # Emit batch stats so the wrapper can update running_mean / running_var.
    mean_ref[...] = mean
    var_ref[...] = var


# ----------------------------------------------------------------------------
# Host-side preparation / wrappers
# ----------------------------------------------------------------------------
def _vmem():
    return pl.BlockSpec(memory_space=pltpu.MemorySpace.VMEM)


def prepare_params(params):
    """Fold eval-mode BatchNorm into fc1 and pad fc2 to 128 output lanes.

    Re-run after running stats change if eval parity with updated stats is needed.
    """
    scale = params["gamma"] * jax.lax.rsqrt(params["running_var"] + BN_EPS)
    w1_eval = params["w1"] * scale                               # (in, hidden)
    b1_eval = (params["b1"] - params["running_mean"]) * scale + params["beta"]
    out_dim = params["w2"].shape[1]
    pad = _round_up(out_dim, LANE) - out_dim
    w2_pad = jnp.pad(params["w2"], ((0, 0), (0, pad)))
    b2_pad = jnp.pad(params["b2"], ((0, 0), (0, pad)))
    prepared = dict(params)
    prepared.update(w1_eval=w1_eval, b1_eval=b1_eval,
                    w2_pad=w2_pad, b2_pad=b2_pad)
    return prepared


@functools.partial(jax.jit, static_argnames=("mode",))
def mlp_forward(x, prepared, mode="eval", rng_key=None):
    """x: (batch, input_dim) f32 -> (batch, output_dim) f32.

    train mode returns (y, batch_mean, batch_var) for running-stat updates.
    """
    batch, in_dim = x.shape
    hidden = prepared["w1"].shape[1]
    out_dim = prepared["w2"].shape[1]
    lane_out = prepared["w2_pad"].shape[1]

    if mode == "eval":
        # Grid over the batch axis; weights stay resident (index_map -> (0, 0)).
        # For input_dim=3584, hidden=128: w1 tile is ~1.8 MiB, trivially fits
        # VMEM on v5e/v6e/v7x; for very large input_dim the K axis would need
        # its own grid dimension.
        block_m = min(256, _round_up(batch, 8))
        padded = _round_up(batch, block_m)
        x_in = jnp.pad(x, ((0, padded - batch), (0, 0))) if padded != batch else x
        y = pl.pallas_call(
            _mlp_eval_kernel,
            out_shape=jax.ShapeDtypeStruct((padded, lane_out), jnp.float32),
            grid=(padded // block_m,),
            in_specs=[
                pl.BlockSpec((block_m, in_dim), lambda i: (i, 0)),
                pl.BlockSpec((in_dim, hidden), lambda i: (0, 0)),
                pl.BlockSpec((1, hidden), lambda i: (0, 0)),
                pl.BlockSpec((hidden, lane_out), lambda i: (0, 0)),
                pl.BlockSpec((1, lane_out), lambda i: (0, 0)),
            ],
            out_specs=pl.BlockSpec((block_m, lane_out), lambda i: (i, 0)),
            compiler_params=pltpu.CompilerParams(
                dimension_semantics=("parallel",)),
        )(x_in, prepared["w1_eval"], prepared["b1_eval"],
          prepared["w2_pad"], prepared["b2_pad"])
        return y[:batch, :out_dim]

    # --- train ---
    # TODO(synk): dropout mask comes from jax.random in the wrapper (different
    # RNG stream than torch).  BN batch statistics need the whole batch, so
    # train mode runs as a single block (no batch grid).
    if rng_key is None:
        rng_key = jax.random.PRNGKey(0)
    keep = jax.random.bernoulli(rng_key, 1.0 - DROP_P, (batch, hidden))
    mask = keep.astype(jnp.float32) * (1.0 / (1.0 - DROP_P))
    out_shapes = (
        jax.ShapeDtypeStruct((batch, lane_out), jnp.float32),
        jax.ShapeDtypeStruct((1, hidden), jnp.float32),
        jax.ShapeDtypeStruct((1, hidden), jnp.float32),
    )
    y, bmean, bvar = pl.pallas_call(
        _mlp_train_kernel,
        out_shape=out_shapes,
        in_specs=[_vmem()] * 8,
        out_specs=(_vmem(), _vmem(), _vmem()),
    )(x, prepared["w1"], prepared["b1"], prepared["gamma"], prepared["beta"],
      prepared["w2_pad"], prepared["b2_pad"], mask)
    return y[:, :out_dim], bmean, bvar


def update_running_stats(params, batch_mean, batch_var, batch_size, momentum=0.1):
    """PyTorch BatchNorm1d-style running-stat update (unbiased batch var)."""
    n = float(batch_size)
    unbiased = batch_var * (n / max(n - 1.0, 1.0))
    new = dict(params)
    new["running_mean"] = ((1.0 - momentum) * params["running_mean"]
                           + momentum * batch_mean)
    new["running_var"] = ((1.0 - momentum) * params["running_var"]
                          + momentum * unbiased)
    return new


def init_params(key, input_dim, hidden_dim, output_dim):
    """Deterministic PyTorch-style (uniform +-1/sqrt(fan_in)) initialization."""
    k1, k2, k3, k4 = jax.random.split(key, 4)
    lim1 = 1.0 / jnp.sqrt(input_dim)
    lim2 = 1.0 / jnp.sqrt(hidden_dim)
    return {
        # Linear weights stored transposed relative to PyTorch: (in, out).
        "w1": jax.random.uniform(k1, (input_dim, hidden_dim), jnp.float32,
                                 -lim1, lim1),
        "b1": jax.random.uniform(k2, (1, hidden_dim), jnp.float32, -lim1, lim1),
        "w2": jax.random.uniform(k3, (hidden_dim, output_dim), jnp.float32,
                                 -lim2, lim2),
        "b2": jax.random.uniform(k4, (1, output_dim), jnp.float32, -lim2, lim2),
        # BatchNorm1d parameters / running stats (PyTorch defaults).
        "gamma": jnp.ones((1, hidden_dim), jnp.float32),
        "beta": jnp.zeros((1, hidden_dim), jnp.float32),
        "running_mean": jnp.zeros((1, hidden_dim), jnp.float32),
        "running_var": jnp.ones((1, hidden_dim), jnp.float32),
    }


# ----------------------------------------------------------------------------
# Pure-JAX references
# ----------------------------------------------------------------------------
def _reference_eval(x, p):
    h = x @ p["w1"] + p["b1"]
    hn = (h - p["running_mean"]) / jnp.sqrt(p["running_var"] + BN_EPS)
    hn = hn * p["gamma"] + p["beta"]
    a = jnp.where(hn > 0, hn, jnp.exp(hn) - 1.0)
    return a @ p["w2"] + p["b2"]


def _reference_train(x, p, mask):
    h = x @ p["w1"] + p["b1"]
    mean = jnp.mean(h, axis=0, keepdims=True)
    var = jnp.mean((h - mean) ** 2, axis=0, keepdims=True)
    hn = (h - mean) / jnp.sqrt(var + BN_EPS) * p["gamma"] + p["beta"]
    a = jnp.where(hn > 0, hn, jnp.exp(hn) - 1.0)
    return (a * mask) @ p["w2"] + p["b2"], mean, var


if __name__ == "__main__":
    # Module defaults (input_dim=3584, hidden_dim=128, output_dim=1), small batch.
    BATCH, INPUT_DIM, HIDDEN_DIM, OUTPUT_DIM = 8, 3584, 128, 1

    key = jax.random.PRNGKey(0)
    kx, kp, kd = jax.random.split(key, 3)
    x = jax.random.normal(kx, (BATCH, INPUT_DIM), jnp.float32)
    params = init_params(kp, INPUT_DIM, HIDDEN_DIM, OUTPUT_DIM)
    prepared = prepare_params(params)

    # ---- Eval mode (deterministic): check against pure-JAX reference. ----
    y_eval = mlp_forward(x, prepared, mode="eval")
    jax.block_until_ready(y_eval)
    y_ref = _reference_eval(x, params)
    assert y_eval.shape == (BATCH, OUTPUT_DIM)
    assert jnp.allclose(y_eval, y_ref, atol=2e-2, rtol=2e-2), (
        float(jnp.max(jnp.abs(y_eval - y_ref))))

    # ---- Train mode (batch-stat BN + dropout + running-stat update). ----
    y_train, bmean, bvar = mlp_forward(x, prepared, mode="train", rng_key=kd)
    jax.block_until_ready(y_train)
    assert y_train.shape == (BATCH, OUTPUT_DIM)
    assert bool(jnp.all(jnp.isfinite(y_train)))

    # Same mask as inside the wrapper (deterministic given kd).
    keep = jax.random.bernoulli(kd, 1.0 - DROP_P, (BATCH, HIDDEN_DIM))
    mask = keep.astype(jnp.float32) * (1.0 / (1.0 - DROP_P))
    y_tref, m_ref, v_ref = _reference_train(x, params, mask)
    assert jnp.allclose(y_train, y_tref, atol=2e-2, rtol=2e-2)
    assert jnp.allclose(bmean, m_ref, atol=2e-2, rtol=2e-2)
    assert jnp.allclose(bvar, v_ref, atol=2e-2, rtol=2e-2)

    params = update_running_stats(params, bmean, bvar, BATCH)
    jax.block_until_ready(params["running_mean"])

    print("KERNEL_OK")
</pallas_src>

<mosaic_0001>
module attributes {stable_mosaic.version = 11 : i64} {
  func.func @_mlp_eval_kernel(%arg0: i32, %arg1: memref<8x3584xf32, #tpu.memory_space<vmem>>, %arg2: memref<3584x128xf32, #tpu.memory_space<vmem>>, %arg3: memref<1x128xf32, #tpu.memory_space<vmem>>, %arg4: memref<128x128xf32, #tpu.memory_space<vmem>>, %arg5: memref<1x128xf32, #tpu.memory_space<vmem>>, %arg6: memref<8x128xf32, #tpu.memory_space<vmem>>) attributes {dimension_semantics = [#tpu.dimension_semantics<parallel>], iteration_bounds = array<i64: 1>, scalar_prefetch = 0 : i64, scratch_operands = 0 : i64, tpu.core_type = #tpu.core_type<tc>, window_params = [{transform_indices = @transform_0, window_bounds = array<i64: 8, 3584>}, {pipeline_mode = #tpu.pipeline_mode<synchronous>, transform_indices = @transform_1, window_bounds = array<i64: 3584, 128>}, {pipeline_mode = #tpu.pipeline_mode<synchronous>, transform_indices = @transform_2, window_bounds = array<i64: 1, 128>}, {pipeline_mode = #tpu.pipeline_mode<synchronous>, transform_indices = @transform_3, window_bounds = array<i64: 128, 128>}, {pipeline_mode = #tpu.pipeline_mode<synchronous>, transform_indices = @transform_4, window_bounds = array<i64: 1, 128>}, {transform_indices = @transform_5, window_bounds = array<i64: 8, 128>}]} {
    %c0 = arith.constant 0 : index
    %c0_0 = arith.constant 0 : index
    %0 = vector.load %arg1[%c0, %c0_0] : memref<8x3584xf32, #tpu.memory_space<vmem>>, vector<8x3584xf32>
    %c0_1 = arith.constant 0 : index
    %c0_2 = arith.constant 0 : index
    %1 = vector.load %arg2[%c0_1, %c0_2] : memref<3584x128xf32, #tpu.memory_space<vmem>>, vector<3584x128xf32>
    %cst = arith.constant dense<0.000000e+00> : vector<8x128xf32>
    %2 = tpu.matmul %0, %1, %cst {dimension_numbers = #tpu.dot_dimension_numbers<[1], [0], [0], [1], [0, 0, 1, 1], [], []>} : vector<8x3584xf32>, vector<3584x128xf32>, vector<8x128xf32> -> vector<8x128xf32>
    %c0_3 = arith.constant 0 : index
    %c0_4 = arith.constant 0 : index
    %3 = vector.load %arg3[%c0_3, %c0_4] : memref<1x128xf32, #tpu.memory_space<vmem>>, vector<1x128xf32>
    %4 = vector.broadcast %3 : vector<1x128xf32> to vector<8x128xf32>
    %5 = arith.addf %2, %4 : vector<8x128xf32>
    %cst_5 = arith.constant 0.000000e+00 : f32
    %6 = vector.broadcast %cst_5 : f32 to vector<8x128xf32>
    %7 = arith.cmpf ogt, %5, %6 : vector<8x128xf32>
    %8 = math.exp %5 : vector<8x128xf32>
    %cst_6 = arith.constant 1.000000e+00 : f32
    %9 = vector.broadcast %cst_6 : f32 to vector<8x128xf32>
    %10 = arith.subf %8, %9 : vector<8x128xf32>
    %11 = arith.select %7, %5, %10 : vector<8x128xi1>, vector<8x128xf32>
    %c0_7 = arith.constant 0 : index
    %c0_8 = arith.constant 0 : index
    %12 = vector.load %arg4[%c0_7, %c0_8] : memref<128x128xf32, #tpu.memory_space<vmem>>, vector<128x128xf32>
    %cst_9 = arith.constant dense<0.000000e+00> : vector<8x128xf32>
    %13 = tpu.matmul %11, %12, %cst_9 {dimension_numbers = #tpu.dot_dimension_numbers<[1], [0], [0], [1], [0, 0, 1, 1], [], []>} : vector<8x128xf32>, vector<128x128xf32>, vector<8x128xf32> -> vector<8x128xf32>
    %c0_10 = arith.constant 0 : index
    %c0_11 = arith.constant 0 : index
    %14 = vector.load %arg5[%c0_10, %c0_11] : memref<1x128xf32, #tpu.memory_space<vmem>>, vector<1x128xf32>
    %15 = vector.broadcast %14 : vector<1x128xf32> to vector<8x128xf32>
    %16 = arith.addf %13, %15 : vector<8x128xf32>
    %c0_12 = arith.constant 0 : index
    %c0_13 = arith.constant 0 : index
    %17 = vector.load %arg6[%c0_12, %c0_13] : memref<8x128xf32, #tpu.memory_space<vmem>>, vector<8x128xf32>
    tpu.vector_store %arg6[%c0_12, %c0_13], %16 {strides = array<i32>} : memref<8x128xf32, #tpu.memory_space<vmem>>, vector<8x128xf32>,
    return
  }
  func.func @transform_0(%arg0: i32) -> (i32, i32) {
    %c0_i32 = arith.constant 0 : i32
    %c0_i32_0 = arith.constant 0 : i32
    return %arg0, %c0_i32 : i32, i32
  }
  func.func @transform_1(%arg0: i32) -> (i32, i32) {
    %c0_i32 = arith.constant 0 : i32
    %c0_i32_0 = arith.constant 0 : i32
    %c0_i32_1 = arith.constant 0 : i32
    return %c0_i32, %c0_i32_0 : i32, i32
  }
  func.func @transform_2(%arg0: i32) -> (i32, i32) {
    %c0_i32 = arith.constant 0 : i32
    %c0_i32_0 = arith.constant 0 : i32
    %c0_i32_1 = arith.constant 0 : i32
    return %c0_i32, %c0_i32_0 : i32, i32
  }
  func.func @transform_3(%arg0: i32) -> (i32, i32) {
    %c0_i32 = arith.constant 0 : i32
    %c0_i32_0 = arith.constant 0 : i32
    %c0_i32_1 = arith.constant 0 : i32
    return %c0_i32, %c0_i32_0 : i32, i32
  }
  func.func @transform_4(%arg0: i32) -> (i32, i32) {
    %c0_i32 = arith.constant 0 : i32
    %c0_i32_0 = arith.constant 0 : i32
    %c0_i32_1 = arith.constant 0 : i32
    return %c0_i32, %c0_i32_0 : i32, i32
  }
  func.func @transform_5(%arg0: i32) -> (i32, i32) {
    %c0_i32 = arith.constant 0 : i32
    %c0_i32_0 = arith.constant 0 : i32
    return %arg0, %c0_i32 : i32, i32
  }
}

</mosaic_0001>

<llo_original>
// kernel: mlp_forward.1
$region0: #{mlp_forward.1}
  #allocation0 [shape = 'u32[]', space=smem, size = 0x4, offset = 0x4, fixed_abs, tag = 'smem constant byte address 0x4 - core index']
  #allocation1 [shape = 'u32[72,128]{1,0:T(1,128)}', space=vmem, size = 0x9000, scoped, tag = 'internal scratch']
  %s0 = inlined_call_operand.hbm [shape: f32[8,3584], index: 0, kind: input, shape index: {}]
  %s1 = inlined_call_operand.hbm [shape: f32[3584,128], index: 1, kind: input, shape index: {}]
  %s2 = inlined_call_operand.hbm [shape: f32[1,128], index: 2, kind: input, shape index: {}]
  %s3 = inlined_call_operand.hbm [shape: f32[128,128], index: 3, kind: input, shape index: {}]
  %s4 = inlined_call_operand.hbm [shape: f32[1,128], index: 4, kind: input, shape index: {}]
  %s5 = inlined_call_operand.vmem [shape: f32[8,128], index: 5, kind: output, shape index: {}]
  %s6 = sld [smem:[#allocation0]]
  $region50: #{mlp_forward.1} parent=0
    _
  %s8 = ssub.s32 1, %s6
  %s9 = scalar_select 0, %s8, %s6
  $region1: #{mlp_forward.1} parent=0
    #allocation2 [shape = 'u8[114688]{0}', space=vmem, size = 0x1c000, scoped, tag = 'input window, operand 0, single buffered']
    #allocation3 [shape = 's32[1]{0}', space=sflag, size = 0x4, scoped, tag = 'scoped memory for mlp_forward.1']
    #allocation4 [shape = 'u8[1835008]{0}', space=vmem, size = 0x1c0000, scoped, tag = 'input window, operand 1, single buffered']
    #allocation5 [shape = 's32[1]{0}', space=sflag, size = 0x4, scoped, tag = 'scoped memory for mlp_forward.1']
    #allocation6 [shape = 'u8[512]{0}', space=vmem, size = 0x400, scoped, tag = 'input window, operand 2, single buffered']
    #allocation7 [shape = 'u8[65536]{0}', space=vmem, size = 0x10000, scoped, tag = 'input window, operand 3, single buffered']
    #allocation8 [shape = 's32[1]{0}', space=sflag, size = 0x4, scoped, tag = 'scoped memory for mlp_forward.1']
    #allocation9 [shape = 'u8[512]{0}', space=vmem, size = 0x400, scoped, tag = 'input window, operand 4, single buffered']
    %10 = vsyncpa [#allocation3], 0
    %11 = vsyncpa [#allocation5], 0
    %12 = vsyncpa [#allocation8], 0
    // Predicated region
    $region2: #{mlp_forward.1} parent=1 // pred_check
      _
    $region3: #{mlp_forward.1} parent=1 // pred_check_branch
      %14 = sbr.rel (0) target = $region5
    $region4: #{mlp_forward.1} parent=1 // pred_region
      %16 = vsyncadd [#allocation3], 0
      %s18 = sshll.u32 %s0, 4
      %s19 = int_to_ptr.hbm [resolvable:$true] %s18
      %s20 = sshll.u32 [#allocation2], 4
      %s21 = int_to_ptr.vmem [resolvable:$true] %s20
      %23 = dma.hbm_to_vmem [thread:$0]  %s19, 3584, %s21, [#allocation3]
    $region5: #{mlp_forward.1} parent=1 // pred_fallthru
      _
    // Predicated region
    $region6: #{mlp_forward.1} parent=1 // pred_check
      _
    $region7: #{mlp_forward.1} parent=1 // pred_check_branch
      %25 = sbr.rel (0) target = $region9
    $region8: #{mlp_forward.1} parent=1 // pred_region
      %27 = vsyncadd [#allocation5], 0
      %s28 = sshll.u32 %s1, 4
      %s29 = int_to_ptr.hbm [resolvable:$true] %s28
      %s30 = sshll.u32 [#allocation4], 4
      %s31 = int_to_ptr.vmem [resolvable:$true] %s30
      %36 = dma.hbm_to_vmem [thread:$0]  %s29, 57344, %s31, [#allocation5], 128, 128, 8
    $region9: #{mlp_forward.1} parent=1 // pred_fallthru
      _
    // Predicated region
    $region10: #{mlp_forward.1} parent=1 // pred_check
      _
    $region11: #{mlp_forward.1} parent=1 // pred_check_branch
      %38 = sbr.rel (0) target = $region13
    $region12: #{mlp_forward.1} parent=1 // pred_region
      %40 = vsyncadd [#allocation5], 0
      %s42 = sshll.u32 %s2, 4
      %s43 = int_to_ptr.hbm [resolvable:$true] %s42
      %s44 = sshll.u32 [#allocation6], 4
      %s45 = int_to_ptr.vmem [resolvable:$true] %s44
      %47 = dma.hbm_to_vmem [thread:$0]  %s43, 16, %s45, [#allocation5]
    $region13: #{mlp_forward.1} parent=1 // pred_fallthru
      _
    // Predicated region
    $region14: #{mlp_forward.1} parent=1 // pred_check
      _
    $region15: #{mlp_forward.1} parent=1 // pred_check_branch
      %49 = sbr.rel (0) target = $region17
    $region16: #{mlp_forward.1} parent=1 // pred_region
      %51 = vsyncadd [#allocation8], 0
      %s52 = sshll.u32 %s3, 4
      %s53 = int_to_ptr.hbm [resolvable:$true] %s52
      %s54 = sshll.u32 [#allocation7], 4
      %s55 = int_to_ptr.vmem [resolvable:$true] %s54
      %60 = dma.hbm_to_vmem [thread:$0]  %s53, 2048, %s55, [#allocation8], 128, 128, 8
    $region17: #{mlp_forward.1} parent=1 // pred_fallthru
      _
    // Predicated region
    $region18: #{mlp_forward.1} parent=1 // pred_check
      _
    $region19: #{mlp_forward.1} parent=1 // pred_check_branch
      %62 = sbr.rel (0) target = $region21
    $region20: #{mlp_forward.1} parent=1 // pred_region
      %64 = vsyncadd [#allocation8], 0
      %s66 = sshll.u32 %s4, 4
      %s67 = int_to_ptr.hbm [resolvable:$true] %s66
      %s68 = sshll.u32 [#allocation9], 4
      %s69 = int_to_ptr.vmem [resolvable:$true] %s68
      %71 = dma.hbm_to_vmem [thread:$0]  %s67, 16, %s69, [#allocation8]
    $region21: #{mlp_forward.1} parent=1 // pred_fallthru
      _
    // Predicated region
    $region22: #{mlp_forward.1} parent=1 // pred_check
      _
    $region23: #{mlp_forward.1} parent=1 // pred_check_branch
      %73 = sbr.rel (0) target = $region25
    $region24: #{mlp_forward.1} parent=1 // pred_region
      %75 = dma.done [#allocation3], 3584
    $region25: #{mlp_forward.1} parent=1 // pred_fallthru
      _
    // Predicated region
    $region26: #{mlp_forward.1} parent=1 // pred_check
      _
    $region27: #{mlp_forward.1} parent=1 // pred_check_branch
      %77 = sbr.rel (0) target = $region29
    $region28: #{mlp_forward.1} parent=1 // pred_region
      %79 = dma.done [#allocation5], 57344
    $region29: #{mlp_forward.1} parent=1 // pred_fallthru
      _
    // Predicated region
    $region30: #{mlp_forward.1} parent=1 // pred_check
      _
    $region31: #{mlp_forward.1} parent=1 // pred_check_branch
      %81 = sbr.rel (0) target = $region33
    $region32: #{mlp_forward.1} parent=1 // pred_region
      %83 = dma.done [#allocation5], 16
    $region33: #{mlp_forward.1} parent=1 // pred_fallthru
      _
    // Predicated region
    $region34: #{mlp_forward.1} parent=1 // pred_check
      _
    $region35: #{mlp_forward.1} parent=1 // pred_check_branch
      %85 = sbr.rel (0) target = $region37
    $region36: #{mlp_forward.1} parent=1 // pred_region
      %87 = dma.done [#allocation8], 2048
    $region37: #{mlp_forward.1} parent=1 // pred_fallthru
      _
    // Predicated region
    $region38: #{mlp_forward.1} parent=1 // pred_check
      _
    $region39: #{mlp_forward.1} parent=1 // pred_check_branch
      %89 = sbr.rel (0) target = $region41
    $region40: #{mlp_forward.1} parent=1 // pred_region
      %91 = dma.done [#allocation8], 16
    $region41: #{mlp_forward.1} parent=1 // pred_fallthru
      _
    %v92 = vld [vmem:[#allocation2] sm:$0xff]
    %v93 = vld [vmem:[#allocation2 + $0x8] sm:$0xff]
    %v94 = vld [vmem:[#allocation2 + $0x10] sm:$0xff]
    %v95 = vld [vmem:[#allocation2 + $0x18] sm:$0xff]
    %v96 = vld [vmem:[#allocation2 + $0x20] sm:$0xff]
    %v97 = vld [vmem:[#allocation2 + $0x28] sm:$0xff]
    %v98 = vld [vmem:[#allocation2 + $0x30] sm:$0xff]
    %v99 = vld [vmem:[#allocation2 + $0x38] sm:$0xff]
    %v100 = vld [vmem:[#allocation2 + $0x40] sm:$0xff]
    %v101 = vld [vmem:[#allocation2 + $0x48] sm:$0xff]
    %v102 = vld [vmem:[#allocation2 + $0x50] sm:$0xff]
    %v103 = vld [vmem:[#allocation2 + $0x58] sm:$0xff]
    %v104 = vld [vmem:[#allocation2 + $0x60] sm:$0xff]
    %v105 = vld [vmem:[#allocation2 + $0x68] sm:$0xff]
    %v106 = vld [vmem:[#allocation2 + $0x70] sm:$0xff]
    %v107 = vld [vmem:[#allocation2 + $0x78] sm:$0xff]
    %v108 = vld [vmem:[#allocation2 + $0x80] sm:$0xff]
    %v109 = vld [vmem:[#allocation2 + $0x88] sm:$0xff]
    %v110 = vld [vmem:[#allocation2 + $0x90] sm:$0xff]
    %v111 = vld [vmem:[#allocation2 + $0x98] sm:$0xff]
    %v112 = vld [vmem:[#allocation2 + $0xa0] sm:$0xff]
    %v113 = vld [vmem:[#allocation2 + $0xa8] sm:$0xff]
    %v114 = vld [vmem:[#allocation2 + $0xb0] sm:$0xff]
    %v115 = vld [vmem:[#allocation2 + $0xb8] sm:$0xff]
    %v116 = vld [vmem:[#allocation2 + $0xc0] sm:$0xff]
    %v117 = vld [vmem:[#allocation2 + $0xc8] sm:$0xff]
    %v118 = vld [vmem:[#allocation2 + $0xd0] sm:$0xff]
    %v119 = vld [vmem:[#allocation2 + $0xd8] sm:$0xff]
    %v120 = vld [vmem:[#allocation4] sm:$0xff]
    %v121 = vld [vmem:[#allocation4 + $0x8] sm:$0xff]
    %v122 = vld [vmem:[#allocation4 + $0x10] sm:$0xff]
    %v123 = vld [vmem:[#allocation4 + $0x18] sm:$0xff]
    %v124 = vld [vmem:[#allocation4 + $0x20] sm:$0xff]
    %v125 = vld [vmem:[#allocation4 + $0x28] sm:$0xff]
    %v126 = vld [vmem:[#allocation4 + $0x30] sm:$0xff]
    %v127 = vld [vmem:[#allocation4 + $0x38] sm:$0xff]
    %v128 = vld [vmem:[#allocation4 + $0x40] sm:$0xff]
    %v129 = vld [vmem:[#allocation4 + $0x48] sm:$0xff]
    %v130 = vld [vmem:[#allocation4 + $0x50] sm:$0xff]
    %v131 = vld [vmem:[#allocation4 + $0x58] sm:$0xff]
    %v132 = vld [vmem:[#allocation4 + $0x60] sm:$0xff]
    %v133 = vld [vmem:[#allocation4 + $0x68] sm:$0xff]
    %v134 = vld [vmem:[#allocation4 + $0x70] sm:$0xff]
    %v135 = vld [vmem:[#allocation4 + $0x78] sm:$0xff]
    %v136 = vld [vmem:[#allocation4 + $0x80] sm:$0xff]
    %v137 = vld [vmem:[#allocation4 + $0x88] sm:$0xff]
    %v138 = vld [vmem:[#allocation4 + $0x90] sm:$0xff]
    %v139 = vld [vmem:[#allocation4 + $0x98] sm:$0xff]
    %v140 = vld [vmem:[#allocation4 + $0xa0] sm:$0xff]
    %v141 = vld [vmem:[#allocation4 + $0xa8] sm:$0xff]
    %v142 = vld [vmem:[#allocation4 + $0xb0] sm:$0xff]
    %v143 = vld [vmem:[#allocation4 + $0xb8] sm:$0xff]
    %v144 = vld [vmem:[#allocation4 + $0xc0] sm:$0xff]
    %v145 = vld [vmem:[#allocation4 + $0xc8] sm:$0xff]
    %v146 = vld [vmem:[#allocation4 + $0xd0] sm:$0xff]
    %v147 = vld [vmem:[#allocation4 + $0xd8] sm:$0xff]
    %v148 = vld [vmem:[#allocation4 + $0xe0] sm:$0xff]
    %v149 = vld [vmem:[#allocation4 + $0xe8] sm:$0xff]
    %v150 = vld [vmem:[#allocation4 + $0xf0] sm:$0xff]
    %v151 = vld [vmem:[#allocation4 + $0xf8] sm:$0xff]
    %v152 = vld [vmem:[#allocation4 + $0x100] sm:$0xff]
    %v153 = vld [vmem:[#allocation4 + $0x108] sm:$0xff]
    %v154 = vld [vmem:[#allocation4 + $0x110] sm:$0xff]
    %v155 = vld [vmem:[#allocation4 + $0x118] sm:$0xff]
    %v156 = vld [vmem:[#allocation4 + $0x120] sm:$0xff]
    %v157 = vld [vmem:[#allocation4 + $0x128] sm:$0xff]
    %v158 = vld [vmem:[#allocation4 + $0x130] sm:$0xff]
    %v159 = vld [vmem:[#allocation4 + $0x138] sm:$0xff]
    %v160 = vld [vmem:[#allocation4 + $0x140] sm:$0xff]
    %v161 = vld [vmem:[#allocation4 + $0x148] sm:$0xff]
    %v162 = vld [vmem:[#allocation4 + $0x150] sm:$0xff]
    %v163 = vld [vmem:[#allocation4 + $0x158] sm:$0xff]
    %v164 = vld [vmem:[#allocation4 + $0x160] sm:$0xff]
    %v165 = vld [vmem:[#allocation4 + $0x168] sm:$0xff]
    %v166 = vld [vmem:[#allocation4 + $0x170] sm:$0xff]
    %v167 = vld [vmem:[#allocation4 + $0x178] sm:$0xff]
    %v168 = vld [vmem:[#allocation4 + $0x180] sm:$0xff]
    %v169 = vld [vmem:[#allocation4 + $0x188] sm:$0xff]
    %v170 = vld [vmem:[#allocation4 + $0x190] sm:$0xff]
    %v171 = vld [vmem:[#allocation4 + $0x198] sm:$0xff]
    %v172 = vld [vmem:[#allocation4 + $0x1a0] sm:$0xff]
    %v173 = vld [vmem:[#allocation4 + $0x1a8] sm:$0xff]
    %v174 = vld [vmem:[#allocation4 + $0x1b0] sm:$0xff]
    %v175 = vld [vmem:[#allocation4 + $0x1b8] sm:$0xff]
    %v176 = vld [vmem:[#allocation4 + $0x1c0] sm:$0xff]
    %v177 = vld [vmem:[#allocation4 + $0x1c8] sm:$0xff]
    %v178 = vld [vmem:[#allocation4 + $0x1d0] sm:$0xff]
    %v179 = vld [vmem:[#allocation4 + $0x1d8] sm:$0xff]
    %v180 = vld [vmem:[#allocation4 + $0x1e0] sm:$0xff]
    %v181 = vld [vmem:[#allocation4 + $0x1e8] sm:$0xff]
    %v182 = vld [vmem:[#allocation4 + $0x1f0] sm:$0xff]
    %v183 = vld [vmem:[#allocation4 + $0x1f8] sm:$0xff]
    %v184 = vld [vmem:[#allocation4 + $0x200] sm:$0xff]
    %v185 = vld [vmem:[#allocation4 + $0x208] sm:$0xff]
    %v186 = vld [vmem:[#allocation4 + $0x210] sm:$0xff]
    %v187 = vld [vmem:[#allocation4 + $0x218] sm:$0xff]
    %v188 = vld [vmem:[#allocation4 + $0x220] sm:$0xff]
    %v189 = vld [vmem:[#allocation4 + $0x228] sm:$0xff]
    %v190 = vld [vmem:[#allocation4 + $0x230] sm:$0xff]
    %v191 = vld [vmem:[#allocation4 + $0x238] sm:$0xff]
    %v192 = vld [vmem:[#allocation4 + $0x240] sm:$0xff]
    %v193 = vld [vmem:[#allocation4 + $0x248] sm:$0xff]
    %v194 = vld [vmem:[#allocation4 + $0x250] sm:$0xff]
    %v195 = vld [vmem:[#allocation4 + $0x258] sm:$0xff]
    %v196 = vld [vmem:[#allocation4 + $0x260] sm:$0xff]
    %v197 = vld [vmem:[#allocation4 + $0x268] sm:$0xff]
    %v198 = vld [vmem:[#allocation4 + $0x270] sm:$0xff]
    %v199 = vld [vmem:[#allocation4 + $0x278] sm:$0xff]
    %v200 = vld [vmem:[#allocation4 + $0x280] sm:$0xff]
    %v201 = vld [vmem:[#allocation4 + $0x288] sm:$0xff]
    %v202 = vld [vmem:[#allocation4 + $0x290] sm:$0xff]
    %v203 = vld [vmem:[#allocation4 + $0x298] sm:$0xff]
    %v204 = vld [vmem:[#allocation4 + $0x2a0] sm:$0xff]
    %v205 = vld [vmem:[#allocation4 + $0x2a8] sm:$0xff]
    %v206 = vld [vmem:[#allocation4 + $0x2b0] sm:$0xff]
    %v207 = vld [vmem:[#allocation4 + $0x2b8] sm:$0xff]
    %v208 = vld [vmem:[#allocation4 + $0x2c0] sm:$0xff]
    %v209 = vld [vmem:[#allocation4 + $0x2c8] sm:$0xff]
    %v210 = vld [vmem:[#allocation4 + $0x2d0] sm:$0xff]
    %v211 = vld [vmem:[#allocation4 + $0x2d8] sm:$0xff]
    %v212 = vld [vmem:[#allocation4 + $0x2e0] sm:$0xff]
    %v213 = vld [vmem:[#allocation4 + $0x2e8] sm:$0xff]
    %v214 = vld [vmem:[#allocation4 + $0x2f0] sm:$0xff]
    %v215 = vld [vmem:[#allocation4 + $0x2f8] sm:$0xff]
    %v216 = vld [vmem:[#allocation4 + $0x300] sm:$0xff]
    %v217 = vld [vmem:[#allocation4 + $0x308] sm:$0xff]
    %v218 = vld [vmem:[#allocation4 + $0x310] sm:$0xff]
    %v219 = vld [vmem:[#allocation4 + $0x318] sm:$0xff]
    %v220 = vld [vmem:[#allocation4 + $0x320] sm:$0xff]
    %v221 = vld [vmem:[#allocation4 + $0x328] sm:$0xff]
    %v222 = vld [vmem:[#allocation4 + $0x330] sm:$0xff]
    %v223 = vld [vmem:[#allocation4 + $0x338] sm:$0xff]
    %v224 = vld [vmem:[#allocation4 + $0x340] sm:$0xff]
    %v225 = vld [vmem:[#allocation4 + $0x348] sm:$0xff]
    %v226 = vld [vmem:[#allocation4 + $0x350] sm:$0xff]
    %v227 = vld [vmem:[#allocation4 + $0x358] sm:$0xff]
    %v228 = vld [vmem:[#allocation4 + $0x360] sm:$0xff]
    %v229 = vld [vmem:[#allocation4 + $0x368] sm:$0xff]
    %v230 = vld [vmem:[#allocation4 + $0x370] sm:$0xff]
    %v231 = vld [vmem:[#allocation4 + $0x378] sm:$0xff]
    %v232 = vld [vmem:[#allocation4 + $0x380] sm:$0xff]
    %v233 = vld [vmem:[#allocation4 + $0x388] sm:$0xff]
    %v234 = vld [vmem:[#allocation4 + $0x390] sm:$0xff]
    %v235 = vld [vmem:[#allocation4 + $0x398] sm:$0xff]
    %v236 = vld [vmem:[#allocation4 + $0x3a0] sm:$0xff]
    %v237 = vld [vmem:[#allocation4 + $0x3a8] sm:$0xff]
    %v238 = vld [vmem:[#allocation4 + $0x3b0] sm:$0xff]
    %v239 = vld [vmem:[#allocation4 + $0x3b8] sm:$0xff]
    %v240 = vld [vmem:[#allocation4 + $0x3c0] sm:$0xff]
    %v241 = vld [vmem:[#allocation4 + $0x3c8] sm:$0xff]
    %v242 = vld [vmem:[#allocation4 + $0x3d0] sm:$0xff]
    %v243 = vld [vmem:[#allocation4 + $0x3d8] sm:$0xff]
    %v244 = vld [vmem:[#allocation4 + $0x3e0] sm:$0xff]
    %v245 = vld [vmem:[#allocation4 + $0x3e8] sm:$0xff]
    %v246 = vld [vmem:[#allocation4 + $0x3f0] sm:$0xff]
    %v247 = vld [vmem:[#allocation4 + $0x3f8] sm:$0xff]
    %v248 = vld [vmem:[#allocation4 + $0x400] sm:$0xff]
    %v249 = vld [vmem:[#allocation4 + $0x408] sm:$0xff]
    %v250 = vld [vmem:[#allocation4 + $0x410] sm:$0xff]
    %v251 = vld [vmem:[#allocation4 + $0x418] sm:$0xff]
    %v252 = vld [vmem:[#allocation4 + $0x420] sm:$0xff]
    %v253 = vld [vmem:[#allocation4 + $0x428] sm:$0xff]
    %v254 = vld [vmem:[#allocation4 + $0x430] sm:$0xff]
    %v255 = vld [vmem:[#allocation4 + $0x438] sm:$0xff]
    %v256 = vld [vmem:[#allocation4 + $0x440] sm:$0xff]
    %v257 = vld [vmem:[#allocation4 + $0x448] sm:$0xff]
    %v258 = vld [vmem:[#allocation4 + $0x450] sm:$0xff]
    %v259 = vld [vmem:[#allocation4 + $0x458] sm:$0xff]
    %v260 = vld [vmem:[#allocation4 + $0x460] sm:$0xff]
    %v261 = vld [vmem:[#allocation4 + $0x468] sm:$0xff]
    %v262 = vld [vmem:[#allocation4 + $0x470] sm:$0xff]
    %v263 = vld [vmem:[#allocation4 + $0x478] sm:$0xff]
    %v264 = vld [vmem:[#allocation4 + $0x480] sm:$0xff]
    %v265 = vld [vmem:[#allocation4 + $0x488] sm:$0xff]
    %v266 = vld [vmem:[#allocation4 + $0x490] sm:$0xff]
    %v267 = vld [vmem:[#allocation4 + $0x498] sm:$0xff]
    %v268 = vld [vmem:[#allocation4 + $0x4a0] sm:$0xff]
    %v269 = vld [vmem:[#allocation4 + $0x4a8] sm:$0xff]
    %v270 = vld [vmem:[#allocation4 + $0x4b0] sm:$0xff]
    %v271 = vld [vmem:[#allocation4 + $0x4b8] sm:$0xff]
    %v272 = vld [vmem:[#allocation4 + $0x4c0] sm:$0xff]
    %v273 = vld [vmem:[#allocation4 + $0x4c8] sm:$0xff]
    %v274 = vld [vmem:[#allocation4 + $0x4d0] sm:$0xff]
    %v275 = vld [vmem:[#allocation4 + $0x4d8] sm:$0xff]
    %v276 = vld [vmem:[#allocation4 + $0x4e0] sm:$0xff]
    %v277 = vld [vmem:[#allocation4 + $0x4e8] sm:$0xff]
    %v278 = vld [vmem:[#allocation4 + $0x4f0] sm:$0xff]
    %v279 = vld [vmem:[#allocation4 + $0x4f8] sm:$0xff]
    %v280 = vld [vmem:[#allocation4 + $0x500] sm:$0xff]
    %v281 = vld [vmem:[#allocation4 + $0x508] sm:$0xff]
    %v282 = vld [vmem:[#allocation4 + $0x510] sm:$0xff]
    %v283 = vld [vmem:[#allocation4 + $0x518] sm:$0xff]
    %v284 = vld [vmem:[#allocation4 + $0x520] sm:$0xff]
    %v285 = vld [vmem:[#allocation4 + $0x528] sm:$0xff]
    %v286 = vld [vmem:[#allocation4 + $0x530] sm:$0xff]
    %v287 = vld [vmem:[#allocation4 + $0x538] sm:$0xff]
    %v288 = vld [vmem:[#allocation4 + $0x540] sm:$0xff]
    %v289 = vld [vmem:[#allocation4 + $0x548] sm:$0xff]
    %v290 = vld [vmem:[#allocation4 + $0x550] sm:$0xff]
    %v291 = vld [vmem:[#allocation4 + $0x558] sm:$0xff]
    %v292 = vld [vmem:[#allocation4 + $0x560] sm:$0xff]
    %v293 = vld [vmem:[#allocation4 + $0x568] sm:$0xff]
    %v294 = vld [vmem:[#allocation4 + $0x570] sm:$0xff]
    %v295 = vld [vmem:[#allocation4 + $0x578] sm:$0xff]
    %v296 = vld [vmem:[#allocation4 + $0x580] sm:$0xff]
    %v297 = vld [vmem:[#allocation4 + $0x588] sm:$0xff]
    %v298 = vld [vmem:[#allocation4 + $0x590] sm:$0xff]
    %v299 = vld [vmem:[#allocation4 + $0x598] sm:$0xff]
    %v300 = vld [vmem:[#allocation4 + $0x5a0] sm:$0xff]
    %v301 = vld [vmem:[#allocation4 + $0x5a8] sm:$0xff]
    %v302 = vld [vmem:[#allocation4 + $0x5b0] sm:$0xff]
    %v303 = vld [vmem:[#allocation4 + $0x5b8] sm:$0xff]
    %v304 = vld [vmem:[#allocation4 + $0x5c0] sm:$0xff]
    %v305 = vld [vmem:[#allocation4 + $0x5c8] sm:$0xff]
    %v306 = vld [vmem:[#allocation4 + $0x5d0] sm:$0xff]
    %v307 = vld [vmem:[#allocation4 + $0x5d8] sm:$0xff]
    %v308 = vld [vmem:[#allocation4 + $0x5e0] sm:$0xff]
    %v309 = vld [vmem:[#allocation4 + $0x5e8] sm:$0xff]
    %v310 = vld [vmem:[#allocation4 + $0x5f0] sm:$0xff]
    %v311 = vld [vmem:[#allocation4 + $0x5f8] sm:$0xff]
    %v312 = vld [vmem:[#allocation4 + $0x600] sm:$0xff]
    %v313 = vld [vmem:[#allocation4 + $0x608] sm:$0xff]
    %v314 = vld [vmem:[#allocation4 + $0x610] sm:$0xff]
    %v315 = vld [vmem:[#allocation4 + $0x618] sm:$0xff]
    %v316 = vld [vmem:[#allocation4 + $0x620] sm:$0xff]
    %v317 = vld [vmem:[#allocation4 + $0x628] sm:$0xff]
    %v318 = vld [vmem:[#allocation4 + $0x630] sm:$0xff]
    %v319 = vld [vmem:[#allocation4 + $0x638] sm:$0xff]
    %v320 = vld [vmem:[#allocation4 + $0x640] sm:$0xff]
    %v321 = vld [vmem:[#allocation4 + $0x648] sm:$0xff]
    %v322 = vld [vmem:[#allocation4 + $0x650] sm:$0xff]
    %v323 = vld [vmem:[#allocation4 + $0x658] sm:$0xff]
    %v324 = vld [vmem:[#allocation4 + $0x660] sm:$0xff]
    %v325 = vld [vmem:[#allocation4 + $0x668] sm:$0xff]
    %v326 = vld [vmem:[#allocation4 + $0x670] sm:$0xff]
    %v327 = vld [vmem:[#allocation4 + $0x678] sm:$0xff]
    %v328 = vld [vmem:[#allocation4 + $0x680] sm:$0xff]
    %v329 = vld [vmem:[#allocation4 + $0x688] sm:$0xff]
    %v330 = vld [vmem:[#allocation4 + $0x690] sm:$0xff]
    %v331 = vld [vmem:[#allocation4 + $0x698] sm:$0xff]
    %v332 = vld [vmem:[#allocation4 + $0x6a0] sm:$0xff]
    %v333 = vld [vmem:[#allocation4 + $0x6a8] sm:$0xff]
    %v334 = vld [vmem:[#allocation4 + $0x6b0] sm:$0xff]
    %v335 = vld [vmem:[#allocation4 + $0x6b8] sm:$0xff]
    %v336 = vld [vmem:[#allocation4 + $0x6c0] sm:$0xff]
    %v337 = vld [vmem:[#allocation4 + $0x6c8] sm:$0xff]
    %v338 = vld [vmem:[#allocation4 + $0x6d0] sm:$0xff]
    %v339 = vld [vmem:[#allocation4 + $0x6d8] sm:$0xff]
    %v340 = vld [vmem:[#allocation4 + $0x6e0] sm:$0xff]
    %v341 = vld [vmem:[#allocation4 + $0x6e8] sm:$0xff]
    %v342 = vld [vmem:[#allocation4 + $0x6f0] sm:$0xff]
    %v343 = vld [vmem:[#allocation4 + $0x6f8] sm:$0xff]
    %v344 = vld [vmem:[#allocation4 + $0x700] sm:$0xff]
    %v345 = vld [vmem:[#allocation4 + $0x708] sm:$0xff]
    %v346 = vld [vmem:[#allocation4 + $0x710] sm:$0xff]
    %v347 = vld [vmem:[#allocation4 + $0x718] sm:$0xff]
    %v348 = vld [vmem:[#allocation4 + $0x720] sm:$0xff]
    %v349 = vld [vmem:[#allocation4 + $0x728] sm:$0xff]
    %v350 = vld [vmem:[#allocation4 + $0x730] sm:$0xff]
    %v351 = vld [vmem:[#allocation4 + $0x738] sm:$0xff]
    %v352 = vld [vmem:[#allocation4 + $0x740] sm:$0xff]
    %v353 = vld [vmem:[#allocation4 + $0x748] sm:$0xff]
    %v354 = vld [vmem:[#allocation4 + $0x750] sm:$0xff]
    %v355 = vld [vmem:[#allocation4 + $0x758] sm:$0xff]
    %v356 = vld [vmem:[#allocation4 + $0x760] sm:$0xff]
    %v357 = vld [vmem:[#allocation4 + $0x768] sm:$0xff]
    %v358 = vld [vmem:[#allocation4 + $0x770] sm:$0xff]
    %v359 = vld [vmem:[#allocation4 + $0x778] sm:$0xff]
    %v360 = vld [vmem:[#allocation4 + $0x780] sm:$0xff]
    %v361 = vld [vmem:[#allocation4 + $0x788] sm:$0xff]
    %v362 = vld [vmem:[#allocation4 + $0x790] sm:$0xff]
    %v363 = vld [vmem:[#allocation4 + $0x798] sm:$0xff]
    %v364 = vld [vmem:[#allocation4 + $0x7a0] sm:$0xff]
    %v365 = vld [vmem:[#allocation4 + $0x7a8] sm:$0xff]
    %v366 = vld [vmem:[#allocation4 + $0x7b0] sm:$0xff]
    %v367 = vld [vmem:[#allocation4 + $0x7b8] sm:$0xff]
    %v368 = vld [vmem:[#allocation4 + $0x7c0] sm:$0xff]
    %v369 = vld [vmem:[#allocation4 + $0x7c8] sm:$0xff]
    %v370 = vld [vmem:[#allocation4 + $0x7d0] sm:$0xff]
    %v371 = vld [vmem:[#allocation4 + $0x7d8] sm:$0xff]
    %v372 = vld [vmem:[#allocation4 + $0x7e0] sm:$0xff]
    %v373 = vld [vmem:[#allocation4 + $0x7e8] sm:$0xff]
    %v374 = vld [vmem:[#allocation4 + $0x7f0] sm:$0xff]
    %v375 = vld [vmem:[#allocation4 + $0x7f8] sm:$0xff]
    %v376 = vld [vmem:[#allocation4 + $0x800] sm:$0xff]
    %v377 = vld [vmem:[#allocation4 + $0x808] sm:$0xff]
    %v378 = vld [vmem:[#allocation4 + $0x810] sm:$0xff]
    %v379 = vld [vmem:[#allocation4 + $0x818] sm:$0xff]
    %v380 = vld [vmem:[#allocation4 + $0x820] sm:$0xff]
    %v381 = vld [vmem:[#allocation4 + $0x828] sm:$0xff]
    %v382 = vld [vmem:[#allocation4 + $0x830] sm:$0xff]
    %v383 = vld [vmem:[#allocation4 + $0x838] sm:$0xff]
    %v384 = vld [vmem:[#allocation4 + $0x840] sm:$0xff]
    %v385 = vld [vmem:[#allocation4 + $0x848] sm:$0xff]
    %v386 = vld [vmem:[#allocation4 + $0x850] sm:$0xff]
    %v387 = vld [vmem:[#allocation4 + $0x858] sm:$0xff]
    %v388 = vld [vmem:[#allocation4 + $0x860] sm:$0xff]
    %v389 = vld [vmem:[#allocation4 + $0x868] sm:$0xff]
    %v390 = vld [vmem:[#allocation4 + $0x870] sm:$0xff]
    %v391 = vld [vmem:[#allocation4 + $0x878] sm:$0xff]
    %v392 = vld [vmem:[#allocation4 + $0x880] sm:$0xff]
    %v393 = vld [vmem:[#allocation4 + $0x888] sm:$0xff]
    %v394 = vld [vmem:[#allocation4 + $0x890] sm:$0xff]
    %v395 = vld [vmem:[#allocation4 + $0x898] sm:$0xff]
    %v396 = vld [vmem:[#allocation4 + $0x8a0] sm:$0xff]
    %v397 = vld [vmem:[#allocation4 + $0x8a8] sm:$0xff]
    %v398 = vld [vmem:[#allocation4 + $0x8b0] sm:$0xff]
    %v399 = vld [vmem:[#allocation4 + $0x8b8] sm:$0xff]
    %v400 = vld [vmem:[#allocation4 + $0x8c0] sm:$0xff]
    %v401 = vld [vmem:[#allocation4 + $0x8c8] sm:$0xff]
    %v402 = vld [vmem:[#allocation4 + $0x8d0] sm:$0xff]
    %v403 = vld [vmem:[#allocation4 + $0x8d8] sm:$0xff]
    %v404 = vld [vmem:[#allocation4 + $0x8e0] sm:$0xff]
    %v405 = vld [vmem:[#allocation4 + $0x8e8] sm:$0xff]
    %v406 = vld [vmem:[#allocation4 + $0x8f0] sm:$0xff]
    %v407 = vld [vmem:[#allocation4 + $0x8f8] sm:$0xff]
    %v408 = vld [vmem:[#allocation4 + $0x900] sm:$0xff]
    %v409 = vld [vmem:[#allocation4 + $0x908] sm:$0xff]
    %v410 = vld [vmem:[#allocation4 + $0x910] sm:$0xff]
    %v411 = vld [vmem:[#allocation4 + $0x918] sm:$0xff]
    %v412 = vld [vmem:[#allocation4 + $0x920] sm:$0xff]
    %v413 = vld [vmem:[#allocation4 + $0x928] sm:$0xff]
    %v414 = vld [vmem:[#allocation4 + $0x930] sm:$0xff]
    %v415 = vld [vmem:[#allocation4 + $0x938] sm:$0xff]
    %v416 = vld [vmem:[#allocation4 + $0x940] sm:$0xff]
    %v417 = vld [vmem:[#allocation4 + $0x948] sm:$0xff]
    %v418 = vld [vmem:[#allocation4 + $0x950] sm:$0xff]
    %v419 = vld [vmem:[#allocation4 + $0x958] sm:$0xff]
    %v420 = vld [vmem:[#allocation4 + $0x960] sm:$0xff]
    %v421 = vld [vmem:[#allocation4 + $0x968] sm:$0xff]
    %v422 = vld [vmem:[#allocation4 + $0x970] sm:$0xff]
    %v423 = vld [vmem:[#allocation4 + $0x978] sm:$0xff]
    %v424 = vld [vmem:[#allocation4 + $0x980] sm:$0xff]
    %v425 = vld [vmem:[#allocation4 + $0x988] sm:$0xff]
    %v426 = vld [vmem:[#allocation4 + $0x990] sm:$0xff]
    %v427 = vld [vmem:[#allocation4 + $0x998] sm:$0xff]
    %v428 = vld [vmem:[#allocation4 + $0x9a0] sm:$0xff]
    %v429 = vld [vmem:[#allocation4 + $0x9a8] sm:$0xff]
    %v430 = vld [vmem:[#allocation4 + $0x9b0] sm:$0xff]
    %v431 = vld [vmem:[#allocation4 + $0x9b8] sm:$0xff]
    %v432 = vld [vmem:[#allocation4 + $0x9c0] sm:$0xff]
    %v433 = vld [vmem:[#allocation4 + $0x9c8] sm:$0xff]
    %v434 = vld [vmem:[#allocation4 + $0x9d0] sm:$0xff]
    %v435 = vld [vmem:[#allocation4 + $0x9d8] sm:$0xff]
    %v436 = vld [vmem:[#allocation4 + $0x9e0] sm:$0xff]
    %v437 = vld [vmem:[#allocation4 + $0x9e8] sm:$0xff]
    %v438 = vld [vmem:[#allocation4 + $0x9f0] sm:$0xff]
    %v439 = vld [vmem:[#allocation4 + $0x9f8] sm:$0xff]
    %v440 = vld [vmem:[#allocation4 + $0xa00] sm:$0xff]
    %v441 = vld [vmem:[#allocation4 + $0xa08] sm:$0xff]
    %v442 = vld [vmem:[#allocation4 + $0xa10] sm:$0xff]
    %v443 = vld [vmem:[#allocation4 + $0xa18] sm:$0xff]
    %v444 = vld [vmem:[#allocation4 + $0xa20] sm:$0xff]
    %v445 = vld [vmem:[#allocation4 + $0xa28] sm:$0xff]
    %v446 = vld [vmem:[#allocation4 + $0xa30] sm:$0xff]
    %v447 = vld [vmem:[#allocation4 + $0xa38] sm:$0xff]
    %v448 = vld [vmem:[#allocation4 + $0xa40] sm:$0xff]
    %v449 = vld [vmem:[#allocation4 + $0xa48] sm:$0xff]
    %v450 = vld [vmem:[#allocation4 + $0xa50] sm:$0xff]
    %v451 = vld [vmem:[#allocation4 + $0xa58] sm:$0xff]
    %v452 = vld [vmem:[#allocation4 + $0xa60] sm:$0xff]
    %v453 = vld [vmem:[#allocation4 + $0xa68] sm:$0xff]
    %v454 = vld [vmem:[#allocation4 + $0xa70] sm:$0xff]
    %v455 = vld [vmem:[#allocation4 + $0xa78] sm:$0xff]
    %v456 = vld [vmem:[#allocation4 + $0xa80] sm:$0xff]
    %v457 = vld [vmem:[#allocation4 + $0xa88] sm:$0xff]
    %v458 = vld [vmem:[#allocation4 + $0xa90] sm:$0xff]
    %v459 = vld [vmem:[#allocation4 + $0xa98] sm:$0xff]
    %v460 = vld [vmem:[#allocation4 + $0xaa0] sm:$0xff]
    %v461 = vld [vmem:[#allocation4 + $0xaa8] sm:$0xff]
    %v462 = vld [vmem:[#allocation4 + $0xab0] sm:$0xff]
    %v463 = vld [vmem:[#allocation4 + $0xab8] sm:$0xff]
    %v464 = vld [vmem:[#allocation4 + $0xac0] sm:$0xff]
    %v465 = vld [vmem:[#allocation4 + $0xac8] sm:$0xff]
    %v466 = vld [vmem:[#allocation4 + $0xad0] sm:$0xff]
    %v467 = vld [vmem:[#allocation4 + $0xad8] sm:$0xff]
    %v468 = vld [vmem:[#allocation4 + $0xae0] sm:$0xff]
    %v469 = vld [vmem:[#allocation4 + $0xae8] sm:$0xff]
    %v470 = vld [vmem:[#allocation4 + $0xaf0] sm:$0xff]
    %v471 = vld [vmem:[#allocation4 + $0xaf8] sm:$0xff]
    %v472 = vld [vmem:[#allocation4 + $0xb00] sm:$0xff]
    %v473 = vld [vmem:[#allocation4 + $0xb08] sm:$0xff]
    %v474 = vld [vmem:[#allocation4 + $0xb10] sm:$0xff]
    %v475 = vld [vmem:[#allocation4 + $0xb18] sm:$0xff]
    %v476 = vld [vmem:[#allocation4 + $0xb20] sm:$0xff]
    %v477 = vld [vmem:[#allocation4 + $0xb28] sm:$0xff]
    %v478 = vld [vmem:[#allocation4 + $0xb30] sm:$0xff]
    %v479 = vld [vmem:[#allocation4 + $0xb38] sm:$0xff]
    %v480 = vld [vmem:[#allocation4 + $0xb40] sm:$0xff]
    %v481 = vld [vmem:[#allocation4 + $0xb48] sm:$0xff]
    %v482 = vld [vmem:[#allocation4 + $0xb50] sm:$0xff]
    %v483 = vld [vmem:[#allocation4 + $0xb58] sm:$0xff]
    %v484 = vld [vmem:[#allocation4 + $0xb60] sm:$0xff]
    %v485 = vld [vmem:[#allocation4 + $0xb68] sm:$0xff]
    %v486 = vld [vmem:[#allocation4 + $0xb70] sm:$0xff]
    %v487 = vld [vmem:[#allocation4 + $0xb78] sm:$0xff]
    %v488 = vld [vmem:[#allocation4 + $0xb80] sm:$0xff]
    %v489 = vld [vmem:[#allocation4 + $0xb88] sm:$0xff]
    %v490 = vld [vmem:[#allocation4 + $0xb90] sm:$0xff]
    %v491 = vld [vmem:[#allocation4 + $0xb98] sm:$0xff]
    %v492 = vld [vmem:[#allocation4 + $0xba0] sm:$0xff]
    %v493 = vld [vmem:[#allocation4 + $0xba8] sm:$0xff]
    %v494 = vld [vmem:[#allocation4 + $0xbb0] sm:$0xff]
    %v495 = vld [vmem:[#allocation4 + $0xbb8] sm:$0xff]
    %v496 = vld [vmem:[#allocation4 + $0xbc0] sm:$0xff]
    %v497 = vld [vmem:[#allocation4 + $0xbc8] sm:$0xff]
    %v498 = vld [vmem:[#allocation4 + $0xbd0] sm:$0xff]
    %v499 = vld [vmem:[#allocation4 + $0xbd8] sm:$0xff]
    %v500 = vld [vmem:[#allocation4 + $0xbe0] sm:$0xff]
    %v501 = vld [vmem:[#allocation4 + $0xbe8] sm:$0xff]
    %v502 = vld [vmem:[#allocation4 + $0xbf0] sm:$0xff]
    %v503 = vld [vmem:[#allocation4 + $0xbf8] sm:$0xff]
    %v504 = vld [vmem:[#allocation4 + $0xc00] sm:$0xff]
    %v505 = vld [vmem:[#allocation4 + $0xc08] sm:$0xff]
    %v506 = vld [vmem:[#allocation4 + $0xc10] sm:$0xff]
    %v507 = vld [vmem:[#allocation4 + $0xc18] sm:$0xff]
    %v508 = vld [vmem:[#allocation4 + $0xc20] sm:$0xff]
    %v509 = vld [vmem:[#allocation4 + $0xc28] sm:$0xff]
    %v510 = vld [vmem:[#allocation4 + $0xc30] sm:$0xff]
    %v511 = vld [vmem:[#allocation4 + $0xc38] sm:$0xff]
    %v512 = vld [vmem:[#allocation4 + $0xc40] sm:$0xff]
    %v513 = vld [vmem:[#allocation4 + $0xc48] sm:$0xff]
    %v514 = vld [vmem:[#allocation4 + $0xc50] sm:$0xff]
    %v515 = vld [vmem:[#allocation4 + $0xc58] sm:$0xff]
    %v516 = vld [vmem:[#allocation4 + $0xc60] sm:$0xff]
    %v517 = vld [vmem:[#allocation4 + $0xc68] sm:$0xff]
    %v518 = vld [vmem:[#allocation4 + $0xc70] sm:$0xff]
    %v519 = vld [vmem:[#allocation4 + $0xc78] sm:$0xff]
    %v520 = vld [vmem:[#allocation4 + $0xc80] sm:$0xff]
    %v521 = vld [vmem:[#allocation4 + $0xc88] sm:$0xff]
    %v522 = vld [vmem:[#allocation4 + $0xc90] sm:$0xff]
    %v523 = vld [vmem:[#allocation4 + $0xc98] sm:$0xff]
    %v524 = vld [vmem:[#allocation4 + $0xca0] sm:$0xff]
    %v525 = vld [vmem:[#allocation4 + $0xca8] sm:$0xff]
    %v526 = vld [vmem:[#allocation4 + $0xcb0] sm:$0xff]
    %v527 = vld [vmem:[#allocation4 + $0xcb8] sm:$0xff]
    %v528 = vld [vmem:[#allocation4 + $0xcc0] sm:$0xff]
    %v529 = vld [vmem:[#allocation4 + $0xcc8] sm:$0xff]
    %v530 = vld [vmem:[#allocation4 + $0xcd0] sm:$0xff]
    %v531 = vld [vmem:[#allocation4 + $0xcd8] sm:$0xff]
    %v532 = vld [vmem:[#allocation4 + $0xce0] sm:$0xff]
    %v533 = vld [vmem:[#allocation4 + $0xce8] sm:$0xff]
    %v534 = vld [vmem:[#allocation4 + $0xcf0] sm:$0xff]
    %v535 = vld [vmem:[#allocation4 + $0xcf8] sm:$0xff]
    %v536 = vld [vmem:[#allocation4 + $0xd00] sm:$0xff]
    %v537 = vld [vmem:[#allocation4 + $0xd08] sm:$0xff]
    %v538 = vld [vmem:[#allocation4 + $0xd10] sm:$0xff]
    %v539 = vld [vmem:[#allocation4 + $0xd18] sm:$0xff]
    %v540 = vld [vmem:[#allocation4 + $0xd20] sm:$0xff]
    %v541 = vld [vmem:[#allocation4 + $0xd28] sm:$0xff]
    %v542 = vld [vmem:[#allocation4 + $0xd30] sm:$0xff]
    %v543 = vld [vmem:[#allocation4 + $0xd38] sm:$0xff]
    %v544 = vld [vmem:[#allocation4 + $0xd40] sm:$0xff]
    %v545 = vld [vmem:[#allocation4 + $0xd48] sm:$0xff]
    %v546 = vld [vmem:[#allocation4 + $0xd50] sm:$0xff]
    %v547 = vld [vmem:[#allocation4 + $0xd58] sm:$0xff]
    %v548 = vld [vmem:[#allocation4 + $0xd60] sm:$0xff]
    %v549 = vld [vmem:[#allocation4 + $0xd68] sm:$0xff]
    %v550 = vld [vmem:[#allocation4 + $0xd70] sm:$0xff]
    %v551 = vld [vmem:[#allocation4 + $0xd78] sm:$0xff]
    %v552 = vld [vmem:[#allocation4 + $0xd80] sm:$0xff]
    %v553 = vld [vmem:[#allocation4 + $0xd88] sm:$0xff]
    %v554 = vld [vmem:[#allocation4 + $0xd90] sm:$0xff]
    %v555 = vld [vmem:[#allocation4 + $0xd98] sm:$0xff]
    %v556 = vld [vmem:[#allocation4 + $0xda0] sm:$0xff]
    %v557 = vld [vmem:[#allocation4 + $0xda8] sm:$0xff]
    %v558 = vld [vmem:[#allocation4 + $0xdb0] sm:$0xff]
    %v559 = vld [vmem:[#allocation4 + $0xdb8] sm:$0xff]
    %v560 = vld [vmem:[#allocation4 + $0xdc0] sm:$0xff]
    %v561 = vld [vmem:[#allocation4 + $0xdc8] sm:$0xff]
    %v562 = vld [vmem:[#allocation4 + $0xdd0] sm:$0xff]
    %v563 = vld [vmem:[#allocation4 + $0xdd8] sm:$0xff]
    %v564 = vld [vmem:[#allocation4 + $0xde0] sm:$0xff]
    %v565 = vld [vmem:[#allocation4 + $0xde8] sm:$0xff]
    %v566 = vld [vmem:[#allocation4 + $0xdf0] sm:$0xff]
    %v567 = vld [vmem:[#allocation4 + $0xdf8] sm:$0xff]
    %v568 = vld [vmem:[#allocation6] sm:$0x1]
    %v570 = vperm.slane %v568, 0
    %572 = vmatpush.msra.mxu0 %v135
    %573 = vmatpush.msra.mxu0 %v134
    %574 = vmatpush.msra.mxu0 %v133
    %575 = vmatpush.msra.mxu0 %v132
    %576 = vmatpush.msra.mxu0 %v131
    %577 = vmatpush.msra.mxu0 %v130
    %578 = vmatpush.msra.mxu0 %v129
    %579 = vmatpush.msra.mxu0 %v128
    %580 = vmatpush.msra.mxu0 %v127
    %581 = vmatpush.msra.mxu0 %v126
    %582 = vmatpush.msra.mxu0 %v125
    %583 = vmatpush.msra.mxu0 %v124
    %584 = vmatpush.msra.mxu0 %v123
    %585 = vmatpush.msra.mxu0 %v122
    %586 = vmatpush.msra.mxu0 %v121
    %587 = vmatpush.msra.mxu0 %v120
    %588 = vmatmul.f32.gmra.mxu0 %v92
    %v589 = vpop.f32.mrf.mxu0
    %v590 = vadd.f32 %v570, %v589
    %591 = vdwg.mxu0
    %592 = vmatpush.msra.mxu0 %v151
    %593 = vmatpush.msra.mxu0 %v150
    %594 = vmatpush.msra.mxu0 %v149
    %595 = vmatpush.msra.mxu0 %v148
    %596 = vmatpush.msra.mxu0 %v147
    %597 = vmatpush.msra.mxu0 %v146
    %598 = vmatpush.msra.mxu0 %v145
    %599 = vmatpush.msra.mxu0 %v144
    %600 = vmatpush.msra.mxu0 %v143
    %601 = vmatpush.msra.mxu0 %v142
    %602 = vmatpush.msra.mxu0 %v141
    %603 = vmatpush.msra.mxu0 %v140
    %604 = vmatpush.msra.mxu0 %v139
    %605 = vmatpush.msra.mxu0 %v138
    %606 = vmatpush.msra.mxu0 %v137
    %607 = vmatpush.msra.mxu0 %v136
    %608 = vmatmul.f32.gmra.mxu0 %v93
    %v609 = vpop.f32.mrf.mxu0
    %v610 = vadd.f32 %v590, %v609
    %611 = vdwg.mxu0
    %612 = vmatpush.msra.mxu0 %v167
    %613 = vmatpush.msra.mxu0 %v166
    %614 = vmatpush.msra.mxu0 %v165
    %615 = vmatpush.msra.mxu0 %v164
    %616 = vmatpush.msra.mxu0 %v163
    %617 = vmatpush.msra.mxu0 %v162
    %618 = vmatpush.msra.mxu0 %v161
    %619 = vmatpush.msra.mxu0 %v160
    %620 = vmatpush.msra.mxu0 %v159
    %621 = vmatpush.msra.mxu0 %v158
    %622 = vmatpush.msra.mxu0 %v157
    %623 = vmatpush.msra.mxu0 %v156
    %624 = vmatpush.msra.mxu0 %v155
    %625 = vmatpush.msra.mxu0 %v154
    %626 = vmatpush.msra.mxu0 %v153
    %627 = vmatpush.msra.mxu0 %v152
    %628 = vmatmul.f32.gmra.mxu0 %v94
    %v629 = vpop.f32.mrf.mxu0
    %v630 = vadd.f32 %v610, %v629
    %631 = vdwg.mxu0
    %632 = vmatpush.msra.mxu0 %v183
    %633 = vmatpush.msra.mxu0 %v182
    %634 = vmatpush.msra.mxu0 %v181
    %635 = vmatpush.msra.mxu0 %v180
    %636 = vmatpush.msra.mxu0 %v179
    %637 = vmatpush.msra.mxu0 %v178
    %638 = vmatpush.msra.mxu0 %v177
    %639 = vmatpush.msra.mxu0 %v176
    %640 = vmatpush.msra.mxu0 %v175
    %641 = vmatpush.msra.mxu0 %v174
    %642 = vmatpush.msra.mxu0 %v173
    %643 = vmatpush.msra.mxu0 %v172
    %644 = vmatpush.msra.mxu0 %v171
    %645 = vmatpush.msra.mxu0 %v170
    %646 = vmatpush.msra.mxu0 %v169
    %647 = vmatpush.msra.mxu0 %v168
    %648 = vmatmul.f32.gmra.mxu0 %v95
    %v649 = vpop.f32.mrf.mxu0
    %v650 = vadd.f32 %v630, %v649
    %651 = vdwg.mxu0
    %652 = vmatpush.msra.mxu0 %v199
    %653 = vmatpush.msra.mxu0 %v198
    %654 = vmatpush.msra.mxu0 %v197
    %655 = vmatpush.msra.mxu0 %v196
    %656 = vmatpush.msra.mxu0 %v195
    %657 = vmatpush.msra.mxu0 %v194
    %658 = vmatpush.msra.mxu0 %v193
    %659 = vmatpush.msra.mxu0 %v192
    %660 = vmatpush.msra.mxu0 %v191
    %661 = vmatpush.msra.mxu0 %v190
    %662 = vmatpush.msra.mxu0 %v189
    %663 = vmatpush.msra.mxu0 %v188
    %664 = vmatpush.msra.mxu0 %v187
    %665 = vmatpush.msra.mxu0 %v186
    %666 = vmatpush.msra.mxu0 %v185
    %667 = vmatpush.msra.mxu0 %v184
    %668 = vmatmul.f32.gmra.mxu0 %v96
    %v669 = vpop.f32.mrf.mxu0
    %v670 = vadd.f32 %v650, %v669
    %671 = vdwg.mxu0
    %672 = vmatpush.msra.mxu0 %v215
    %673 = vmatpush.msra.mxu0 %v214
    %674 = vmatpush.msra.mxu0 %v213
    %675 = vmatpush.msra.mxu0 %v212
    %676 = vmatpush.msra.mxu0 %v211
    %677 = vmatpush.msra.mxu0 %v210
    %678 = vmatpush.msra.mxu0 %v209
    %679 = vmatpush.msra.mxu0 %v208
    %680 = vmatpush.msra.mxu0 %v207
    %681 = vmatpush.msra.mxu0 %v206
    %682 = vmatpush.msra.mxu0 %v205
    %683 = vmatpush.msra.mxu0 %v204
    %684 = vmatpush.msra.mxu0 %v203
    %685 = vmatpush.msra.mxu0 %v202
    %686 = vmatpush.msra.mxu0 %v201
    %687 = vmatpush.msra.mxu0 %v200
    %688 = vmatmul.f32.gmra.mxu0 %v97
    %v689 = vpop.f32.mrf.mxu0
    %v690 = vadd.f32 %v670, %v689
    %691 = vdwg.mxu0
    %692 = vmatpush.msra.mxu0 %v231
    %693 = vmatpush.msra.mxu0 %v230
    %694 = vmatpush.msra.mxu0 %v229
    %695 = vmatpush.msra.mxu0 %v228
    %696 = vmatpush.msra.mxu0 %v227
    %697 = vmatpush.msra.mxu0 %v226
    %698 = vmatpush.msra.mxu0 %v225
    %699 = vmatpush.msra.mxu0 %v224
    %700 = vmatpush.msra.mxu0 %v223
    %701 = vmatpush.msra.mxu0 %v222
    %702 = vmatpush.msra.mxu0 %v221
    %703 = vmatpush.msra.mxu0 %v220
    %704 = vmatpush.msra.mxu0 %v219
    %705 = vmatpush.msra.mxu0 %v218
    %706 = vmatpush.msra.mxu0 %v217
    %707 = vmatpush.msra.mxu0 %v216
    %708 = vmatmul.f32.gmra.mxu0 %v98
    %v709 = vpop.f32.mrf.mxu0
    %v710 = vadd.f32 %v690, %v709
    %711 = vdwg.mxu0
    %712 = vmatpush.msra.mxu0 %v247
    %713 = vmatpush.msra.mxu0 %v246
    %714 = vmatpush.msra.mxu0 %v245
    %715 = vmatpush.msra.mxu0 %v244
    %716 = vmatpush.msra.mxu0 %v243
    %717 = vmatpush.msra.mxu0 %v242
    %718 = vmatpush.msra.mxu0 %v241
    %719 = vmatpush.msra.mxu0 %v240
    %720 = vmatpush.msra.mxu0 %v239
    %721 = vmatpush.msra.mxu0 %v238
    %722 = vmatpush.msra.mxu0 %v237
    %723 = vmatpush.msra.mxu0 %v236
    %724 = vmatpush.msra.mxu0 %v235
    %725 = vmatpush.msra.mxu0 %v234
    %726 = vmatpush.msra.mxu0 %v233
    %727 = vmatpush.msra.mxu0 %v232
    %728 = vmatmul.f32.gmra.mxu0 %v99
    %v729 = vpop.f32.mrf.mxu0
    %v730 = vadd.f32 %v710, %v729
    %731 = vdwg.mxu0
    %732 = vmatpush.msra.mxu0 %v263
    %733 = vmatpush.msra.mxu0 %v262
    %734 = vmatpush.msra.mxu0 %v261
    %735 = vmatpush.msra.mxu0 %v260
    %736 = vmatpush.msra.mxu0 %v259
    %737 = vmatpush.msra.mxu0 %v258
    %738 = vmatpush.msra.mxu0 %v257
    %739 = vmatpush.msra.mxu0 %v256
    %740 = vmatpush.msra.mxu0 %v255
    %741 = vmatpush.msra.mxu0 %v254
    %742 = vmatpush.msra.mxu0 %v253
    %743 = vmatpush.msra.mxu0 %v252
    %744 = vmatpush.msra.mxu0 %v251
    %745 = vmatpush.msra.mxu0 %v250
    %746 = vmatpush.msra.mxu0 %v249
    %747 = vmatpush.msra.mxu0 %v248
    %748 = vmatmul.f32.gmra.mxu0 %v100
    %v749 = vpop.f32.mrf.mxu0
    %v750 = vadd.f32 %v730, %v749
    %751 = vdwg.mxu0
    %752 = vmatpush.msra.mxu0 %v279
    %753 = vmatpush.msra.mxu0 %v278
    %754 = vmatpush.msra.mxu0 %v277
    %755 = vmatpush.msra.mxu0 %v276
    %756 = vmatpush.msra.mxu0 %v275
    %757 = vmatpush.msra.mxu0 %v274
    %758 = vmatpush.msra.mxu0 %v273
    %759 = vmatpush.msra.mxu0 %v272
    %760 = vmatpush.msra.mxu0 %v271
    %761 = vmatpush.msra.mxu0 %v270
    %762 = vmatpush.msra.mxu0 %v269
    %763 = vmatpush.msra.mxu0 %v268
    %764 = vmatpush.msra.mxu0 %v267
    %765 = vmatpush.msra.mxu0 %v266
    %766 = vmatpush.msra.mxu0 %v265
    %767 = vmatpush.msra.mxu0 %v264
    %768 = vmatmul.f32.gmra.mxu0 %v101
    %v769 = vpop.f32.mrf.mxu0
    %v770 = vadd.f32 %v750, %v769
    %771 = vdwg.mxu0
    %772 = vmatpush.msra.mxu0 %v295
    %773 = vmatpush.msra.mxu0 %v294
    %774 = vmatpush.msra.mxu0 %v293
    %775 = vmatpush.msra.mxu0 %v292
    %776 = vmatpush.msra.mxu0 %v291
    %777 = vmatpush.msra.mxu0 %v290
    %778 = vmatpush.msra.mxu0 %v289
    %779 = vmatpush.msra.mxu0 %v288
    %780 = vmatpush.msra.mxu0 %v287
    %781 = vmatpush.msra.mxu0 %v286
    %782 = vmatpush.msra.mxu0 %v285
    %783 = vmatpush.msra.mxu0 %v284
    %784 = vmatpush.msra.mxu0 %v283
    %785 = vmatpush.msra.mxu0 %v282
    %786 = vmatpush.msra.mxu0 %v281
    %787 = vmatpush.msra.mxu0 %v280
    %788 = vmatmul.f32.gmra.mxu0 %v102
    %v789 = vpop.f32.mrf.mxu0
    %v790 = vadd.f32 %v770, %v789
    %791 = vdwg.mxu0
    %792 = vmatpush.msra.mxu0 %v311
    %793 = vmatpush.msra.mxu0 %v310
    %794 = vmatpush.msra.mxu0 %v309
    %795 = vmatpush.msra.mxu0 %v308
    %796 = vmatpush.msra.mxu0 %v307
    %797 = vmatpush.msra.mxu0 %v306
    %798 = vmatpush.msra.mxu0 %v305
    %799 = vmatpush.msra.mxu0 %v304
    %800 = vmatpush.msra.mxu0 %v303
    %801 = vmatpush.msra.mxu0 %v302
    %802 = vmatpush.msra.mxu0 %v301
    %803 = vmatpush.msra.mxu0 %v300
    %804 = vmatpush.msra.mxu0 %v299
    %805 = vmatpush.msra.mxu0 %v298
    %806 = vmatpush.msra.mxu0 %v297
    %807 = vmatpush.msra.mxu0 %v296
    %808 = vmatmul.f32.gmra.mxu0 %v103
    %v809 = vpop.f32.mrf.mxu0
    %v810 = vadd.f32 %v790, %v809
    %811 = vdwg.mxu0
    %812 = vmatpush.msra.mxu0 %v327
    %813 = vmatpush.msra.mxu0 %v326
    %814 = vmatpush.msra.mxu0 %v325
    %815 = vmatpush.msra.mxu0 %v324
    %816 = vmatpush.msra.mxu0 %v323
    %817 = vmatpush.msra.mxu0 %v322
    %818 = vmatpush.msra.mxu0 %v321
    %819 = vmatpush.msra.mxu0 %v320
    %820 = vmatpush.msra.mxu0 %v319
    %821 = vmatpush.msra.mxu0 %v318
    %822 = vmatpush.msra.mxu0 %v317
    %823 = vmatpush.msra.mxu0 %v316
    %824 = vmatpush.msra.mxu0 %v315
    %825 = vmatpush.msra.mxu0 %v314
    %826 = vmatpush.msra.mxu0 %v313
    %827 = vmatpush.msra.mxu0 %v312
    %828 = vmatmul.f32.gmra.mxu0 %v104
    %v829 = vpop.f32.mrf.mxu0
    %v830 = vadd.f32 %v810, %v829
    %831 = vdwg.mxu0
    %832 = vmatpush.msra.mxu0 %v343
    %833 = vmatpush.msra.mxu0 %v342
    %834 = vmatpush.msra.mxu0 %v341
    %835 = vmatpush.msra.mxu0 %v340
    %836 = vmatpush.msra.mxu0 %v339
    %837 = vmatpush.msra.mxu0 %v338
    %838 = vmatpush.msra.mxu0 %v337
    %839 = vmatpush.msra.mxu0 %v336
    %840 = vmatpush.msra.mxu0 %v335
    %841 = vmatpush.msra.mxu0 %v334
    %842 = vmatpush.msra.mxu0 %v333
    %843 = vmatpush.msra.mxu0 %v332
    %844 = vmatpush.msra.mxu0 %v331
    %845 = vmatpush.msra.mxu0 %v330
    %846 = vmatpush.msra.mxu0 %v329
    %847 = vmatpush.msra.mxu0 %v328
    %848 = vmatmul.f32.gmra.mxu0 %v105
    %v849 = vpop.f32.mrf.mxu0
    %v850 = vadd.f32 %v830, %v849
    %851 = vdwg.mxu0
    %852 = vmatpush.msra.mxu0 %v359
    %853 = vmatpush.msra.mxu0 %v358
    %854 = vmatpush.msra.mxu0 %v357
    %855 = vmatpush.msra.mxu0 %v356
    %856 = vmatpush.msra.mxu0 %v355
    %857 = vmatpush.msra.mxu0 %v354
    %858 = vmatpush.msra.mxu0 %v353
    %859 = vmatpush.msra.mxu0 %v352
    %860 = vmatpush.msra.mxu0 %v351
    %861 = vmatpush.msra.mxu0 %v350
    %862 = vmatpush.msra.mxu0 %v349
    %863 = vmatpush.msra.mxu0 %v348
    %864 = vmatpush.msra.mxu0 %v347
    %865 = vmatpush.msra.mxu0 %v346
    %866 = vmatpush.msra.mxu0 %v345
    %867 = vmatpush.msra.mxu0 %v344
    %868 = vmatmul.f32.gmra.mxu0 %v106
    %v869 = vpop.f32.mrf.mxu0
    %v870 = vadd.f32 %v850, %v869
    %871 = vdwg.mxu0
    %872 = vmatpush.msra.mxu0 %v375
    %873 = vmatpush.msra.mxu0 %v374
    %874 = vmatpush.msra.mxu0 %v373
    %875 = vmatpush.msra.mxu0 %v372
    %876 = vmatpush.msra.mxu0 %v371
    %877 = vmatpush.msra.mxu0 %v370
    %878 = vmatpush.msra.mxu0 %v369
    %879 = vmatpush.msra.mxu0 %v368
    %880 = vmatpush.msra.mxu0 %v367
    %881 = vmatpush.msra.mxu0 %v366
    %882 = vmatpush.msra.mxu0 %v365
    %883 = vmatpush.msra.mxu0 %v364
    %884 = vmatpush.msra.mxu0 %v363
    %885 = vmatpush.msra.mxu0 %v362
    %886 = vmatpush.msra.mxu0 %v361
    %887 = vmatpush.msra.mxu0 %v360
    %888 = vmatmul.f32.gmra.mxu0 %v107
    %v889 = vpop.f32.mrf.mxu0
    %v890 = vadd.f32 %v870, %v889
    %891 = vdwg.mxu0
    %892 = vmatpush.msra.mxu0 %v391
    %893 = vmatpush.msra.mxu0 %v390
    %894 = vmatpush.msra.mxu0 %v389
    %895 = vmatpush.msra.mxu0 %v388
    %896 = vmatpush.msra.mxu0 %v387
    %897 = vmatpush.msra.mxu0 %v386
    %898 = vmatpush.msra.mxu0 %v385
    %899 = vmatpush.msra.mxu0 %v384
    %900 = vmatpush.msra.mxu0 %v383
    %901 = vmatpush.msra.mxu0 %v382
    %902 = vmatpush.msra.mxu0 %v381
    %903 = vmatpush.msra.mxu0 %v380
    %904 = vmatpush.msra.mxu0 %v379
    %905 = vmatpush.msra.mxu0 %v378
    %906 = vmatpush.msra.mxu0 %v377
    %907 = vmatpush.msra.mxu0 %v376
    %908 = vmatmul.f32.gmra.mxu0 %v108
    %v909 = vpop.f32.mrf.mxu0
    %v910 = vadd.f32 %v890, %v909
    %911 = vdwg.mxu0
    %912 = vmatpush.msra.mxu0 %v407
    %913 = vmatpush.msra.mxu0 %v406
    %914 = vmatpush.msra.mxu0 %v405
    %915 = vmatpush.msra.mxu0 %v404
    %916 = vmatpush.msra.mxu0 %v403
    %917 = vmatpush.msra.mxu0 %v402
    %918 = vmatpush.msra.mxu0 %v401
    %919 = vmatpush.msra.mxu0 %v400
    %920 = vmatpush.msra.mxu0 %v399
    %921 = vmatpush.msra.mxu0 %v398
    %922 = vmatpush.msra.mxu0 %v397
    %923 = vmatpush.msra.mxu0 %v396
    %924 = vmatpush.msra.mxu0 %v395
    %925 = vmatpush.msra.mxu0 %v394
    %926 = vmatpush.msra.mxu0 %v393
    %927 = vmatpush.msra.mxu0 %v392
    %928 = vmatmul.f32.gmra.mxu0 %v109
    %v929 = vpop.f32.mrf.mxu0
    %v930 = vadd.f32 %v910, %v929
    %931 = vdwg.mxu0
    %932 = vmatpush.msra.mxu0 %v423
    %933 = vmatpush.msra.mxu0 %v422
    %934 = vmatpush.msra.mxu0 %v421
    %935 = vmatpush.msra.mxu0 %v420
    %936 = vmatpush.msra.mxu0 %v419
    %937 = vmatpush.msra.mxu0 %v418
    %938 = vmatpush.msra.mxu0 %v417
    %939 = vmatpush.msra.mxu0 %v416
    %940 = vmatpush.msra.mxu0 %v415
    %941 = vmatpush.msra.mxu0 %v414
    %942 = vmatpush.msra.mxu0 %v413
    %943 = vmatpush.msra.mxu0 %v412
    %944 = vmatpush.msra.mxu0 %v411
    %945 = vmatpush.msra.mxu0 %v410
    %946 = vmatpush.msra.mxu0 %v409
    %947 = vmatpush.msra.mxu0 %v408
    %948 = vmatmul.f32.gmra.mxu0 %v110
    %v949 = vpop.f32.mrf.mxu0
    %v950 = vadd.f32 %v930, %v949
    %951 = vdwg.mxu0
    %952 = vmatpush.msra.mxu0 %v439
    %953 = vmatpush.msra.mxu0 %v438
    %954 = vmatpush.msra.mxu0 %v437
    %955 = vmatpush.msra.mxu0 %v436
    %956 = vmatpush.msra.mxu0 %v435
    %957 = vmatpush.msra.mxu0 %v434
    %958 = vmatpush.msra.mxu0 %v433
    %959 = vmatpush.msra.mxu0 %v432
    %960 = vmatpush.msra.mxu0 %v431
    %961 = vmatpush.msra.mxu0 %v430
    %962 = vmatpush.msra.mxu0 %v429
    %963 = vmatpush.msra.mxu0 %v428
    %964 = vmatpush.msra.mxu0 %v427
    %965 = vmatpush.msra.mxu0 %v426
    %966 = vmatpush.msra.mxu0 %v425
    %967 = vmatpush.msra.mxu0 %v424
    %968 = vmatmul.f32.gmra.mxu0 %v111
    %v969 = vpop.f32.mrf.mxu0
    %v970 = vadd.f32 %v950, %v969
    %971 = vdwg.mxu0
    %972 = vmatpush.msra.mxu0 %v455
    %973 = vmatpush.msra.mxu0 %v454
    %974 = vmatpush.msra.mxu0 %v453
    %975 = vmatpush.msra.mxu0 %v452
    %976 = vmatpush.msra.mxu0 %v451
    %977 = vmatpush.msra.mxu0 %v450
    %978 = vmatpush.msra.mxu0 %v449
    %979 = vmatpush.msra.mxu0 %v448
    %980 = vmatpush.msra.mxu0 %v447
    %981 = vmatpush.msra.mxu0 %v446
    %982 = vmatpush.msra.mxu0 %v445
    %983 = vmatpush.msra.mxu0 %v444
    %984 = vmatpush.msra.mxu0 %v443
    %985 = vmatpush.msra.mxu0 %v442
    %986 = vmatpush.msra.mxu0 %v441
    %987 = vmatpush.msra.mxu0 %v440
    %988 = vmatmul.f32.gmra.mxu0 %v112
    %v989 = vpop.f32.mrf.mxu0
    %v990 = vadd.f32 %v970, %v989
    %991 = vdwg.mxu0
    %992 = vmatpush.msra.mxu0 %v471
    %993 = vmatpush.msra.mxu0 %v470
    %994 = vmatpush.msra.mxu0 %v469
    %995 = vmatpush.msra.mxu0 %v468
    %996 = vmatpush.msra.mxu0 %v467
    %997 = vmatpush.msra.mxu0 %v466
    %998 = vmatpush.msra.mxu0 %v465
    %999 = vmatpush.msra.mxu0 %v464
    %1000 = vmatpush.msra.mxu0 %v463
    %1001 = vmatpush.msra.mxu0 %v462
    %1002 = vmatpush.msra.mxu0 %v461
    %1003 = vmatpush.msra.mxu0 %v460
    %1004 = vmatpush.msra.mxu0 %v459
    %1005 = vmatpush.msra.mxu0 %v458
    %1006 = vmatpush.msra.mxu0 %v457
    %1007 = vmatpush.msra.mxu0 %v456
    %1008 = vmatmul.f32.gmra.mxu0 %v113
    %v1009 = vpop.f32.mrf.mxu0
    %v1010 = vadd.f32 %v990, %v1009
    %1011 = vdwg.mxu0
    %1012 = vmatpush.msra.mxu0 %v487
    %1013 = vmatpush.msra.mxu0 %v486
    %1014 = vmatpush.msra.mxu0 %v485
    %1015 = vmatpush.msra.mxu0 %v484
    %1016 = vmatpush.msra.mxu0 %v483
    %1017 = vmatpush.msra.mxu0 %v482
    %1018 = vmatpush.msra.mxu0 %v481
    %1019 = vmatpush.msra.mxu0 %v480
    %1020 = vmatpush.msra.mxu0 %v479
    %1021 = vmatpush.msra.mxu0 %v478
    %1022 = vmatpush.msra.mxu0 %v477
    %1023 = vmatpush.msra.mxu0 %v476
    %1024 = vmatpush.msra.mxu0 %v475
    %1025 = vmatpush.msra.mxu0 %v474
    %1026 = vmatpush.msra.mxu0 %v473
    %1027 = vmatpush.msra.mxu0 %v472
    %1028 = vmatmul.f32.gmra.mxu0 %v114
    %v1029 = vpop.f32.mrf.mxu0
    %v1030 = vadd.f32 %v1010, %v1029
    %1031 = vdwg.mxu0
    %1032 = vmatpush.msra.mxu0 %v503
    %1033 = vmatpush.msra.mxu0 %v502
    %1034 = vmatpush.msra.mxu0 %v501
    %1035 = vmatpush.msra.mxu0 %v500
    %1036 = vmatpush.msra.mxu0 %v499
    %1037 = vmatpush.msra.mxu0 %v498
    %1038 = vmatpush.msra.mxu0 %v497
    %1039 = vmatpush.msra.mxu0 %v496
    %1040 = vmatpush.msra.mxu0 %v495
    %1041 = vmatpush.msra.mxu0 %v494
    %1042 = vmatpush.msra.mxu0 %v493
    %1043 = vmatpush.msra.mxu0 %v492
    %1044 = vmatpush.msra.mxu0 %v491
    %1045 = vmatpush.msra.mxu0 %v490
    %1046 = vmatpush.msra.mxu0 %v489
    %1047 = vmatpush.msra.mxu0 %v488
    %1048 = vmatmul.f32.gmra.mxu0 %v115
    %v1049 = vpop.f32.mrf.mxu0
    %v1050 = vadd.f32 %v1030, %v1049
    %1051 = vdwg.mxu0
    %1052 = vmatpush.msra.mxu0 %v519
    %1053 = vmatpush.msra.mxu0 %v518
    %1054 = vmatpush.msra.mxu0 %v517
    %1055 = vmatpush.msra.mxu0 %v516
    %1056 = vmatpush.msra.mxu0 %v515
    %1057 = vmatpush.msra.mxu0 %v514
    %1058 = vmatpush.msra.mxu0 %v513
    %1059 = vmatpush.msra.mxu0 %v512
    %1060 = vmatpush.msra.mxu0 %v511
    %1061 = vmatpush.msra.mxu0 %v510
    %1062 = vmatpush.msra.mxu0 %v509
    %1063 = vmatpush.msra.mxu0 %v508
    %1064 = vmatpush.msra.mxu0 %v507
    %1065 = vmatpush.msra.mxu0 %v506
    %1066 = vmatpush.msra.mxu0 %v505
    %1067 = vmatpush.msra.mxu0 %v504
    %1068 = vmatmul.f32.gmra.mxu0 %v116
    %v1069 = vpop.f32.mrf.mxu0
    %v1070 = vadd.f32 %v1050, %v1069
    %1071 = vdwg.mxu0
    %1072 = vmatpush.msra.mxu0 %v535
    %1073 = vmatpush.msra.mxu0 %v534
    %1074 = vmatpush.msra.mxu0 %v533
    %1075 = vmatpush.msra.mxu0 %v532
    %1076 = vmatpush.msra.mxu0 %v531
    %1077 = vmatpush.msra.mxu0 %v530
    %1078 = vmatpush.msra.mxu0 %v529
    %1079 = vmatpush.msra.mxu0 %v528
    %1080 = vmatpush.msra.mxu0 %v527
    %1081 = vmatpush.msra.mxu0 %v526
    %1082 = vmatpush.msra.mxu0 %v525
    %1083 = vmatpush.msra.mxu0 %v524
    %1084 = vmatpush.msra.mxu0 %v523
    %1085 = vmatpush.msra.mxu0 %v522
    %1086 = vmatpush.msra.mxu0 %v521
    %1087 = vmatpush.msra.mxu0 %v520
    %1088 = vmatmul.f32.gmra.mxu0 %v117
    %v1089 = vpop.f32.mrf.mxu0
    %v1090 = vadd.f32 %v1070, %v1089
    %1091 = vdwg.mxu0
    %1092 = vmatpush.msra.mxu0 %v551
    %1093 = vmatpush.msra.mxu0 %v550
    %1094 = vmatpush.msra.mxu0 %v549
    %1095 = vmatpush.msra.mxu0 %v548
    %1096 = vmatpush.msra.mxu0 %v547
    %1097 = vmatpush.msra.mxu0 %v546
    %1098 = vmatpush.msra.mxu0 %v545
    %1099 = vmatpush.msra.mxu0 %v544
    %1100 = vmatpush.msra.mxu0 %v543
    %1101 = vmatpush.msra.mxu0 %v542
    %1102 = vmatpush.msra.mxu0 %v541
    %1103 = vmatpush.msra.mxu0 %v540
    %1104 = vmatpush.msra.mxu0 %v539
    %1105 = vmatpush.msra.mxu0 %v538
    %1106 = vmatpush.msra.mxu0 %v537
    %1107 = vmatpush.msra.mxu0 %v536
    %1108 = vmatmul.f32.gmra.mxu0 %v118
    %v1109 = vpop.f32.mrf.mxu0
    %v1110 = vadd.f32 %v1090, %v1109
    %1111 = vdwg.mxu0
    %1112 = vmatpush.msra.mxu0 %v567
    %1113 = vmatpush.msra.mxu0 %v566
    %1114 = vmatpush.msra.mxu0 %v565
    %1115 = vmatpush.msra.mxu0 %v564
    %1116 = vmatpush.msra.mxu0 %v563
    %1117 = vmatpush.msra.mxu0 %v562
    %1118 = vmatpush.msra.mxu0 %v561
    %1119 = vmatpush.msra.mxu0 %v560
    %1120 = vmatpush.msra.mxu0 %v559
    %1121 = vmatpush.msra.mxu0 %v558
    %1122 = vmatpush.msra.mxu0 %v557
    %1123 = vmatpush.msra.mxu0 %v556
    %1124 = vmatpush.msra.mxu0 %v555
    %1125 = vmatpush.msra.mxu0 %v554
    %1126 = vmatpush.msra.mxu0 %v553
    %1127 = vmatpush.msra.mxu0 %v552
    %1128 = vmatmul.f32.gmra.mxu0 %v119
    %v1129 = vpop.f32.mrf.mxu0
    %v1130 = vadd.f32 %v1110, %v1129
    %1131 = vdwg.mxu0
    %vm1132 = vcmp.gt.f32.partialorder %v1130, 0.0
    %v1133 = vmul.f32 %v1130, 1.442695
    %v1134 = vpow.pop %v1133
    %v1135 = vsub.f32 %v1134, 1.0
    %v1136 = vsel %vm1132, %v1130, %v1135
    %v1137 = vld [vmem:[#allocation7] sm:$0xff]
    %v1138 = vld [vmem:[#allocation7 + $0x8] sm:$0xff]
    %v1139 = vld [vmem:[#allocation7 + $0x10] sm:$0xff]
    %v1140 = vld [vmem:[#allocation7 + $0x18] sm:$0xff]
    %v1141 = vld [vmem:[#allocation7 + $0x20] sm:$0xff]
    %v1142 = vld [vmem:[#allocation7 + $0x28] sm:$0xff]
    %v1143 = vld [vmem:[#allocation7 + $0x30] sm:$0xff]
    %v1144 = vld [vmem:[#allocation7 + $0x38] sm:$0xff]
    %v1145 = vld [vmem:[#allocation7 + $0x40] sm:$0xff]
    %v1146 = vld [vmem:[#allocation7 + $0x48] sm:$0xff]
    %v1147 = vld [vmem:[#allocation7 + $0x50] sm:$0xff]
    %v1148 = vld [vmem:[#allocation7 + $0x58] sm:$0xff]
    %v1149 = vld [vmem:[#allocation7 + $0x60] sm:$0xff]
    %v1150 = vld [vmem:[#allocation7 + $0x68] sm:$0xff]
    %v1151 = vld [vmem:[#allocation7 + $0x70] sm:$0xff]
    %v1152 = vld [vmem:[#allocation7 + $0x78] sm:$0xff]
    %v1153 = vld [vmem:[#allocation9] sm:$0x1]
    %v1155 = vperm.slane %v1153, 0
    %1157 = vmatpush.msra.mxu0 %v1152
    %1158 = vmatpush.msra.mxu0 %v1151
    %1159 = vmatpush.msra.mxu0 %v1150
    %1160 = vmatpush.msra.mxu0 %v1149
    %1161 = vmatpush.msra.mxu0 %v1148
    %1162 = vmatpush.msra.mxu0 %v1147
    %1163 = vmatpush.msra.mxu0 %v1146
    %1164 = vmatpush.msra.mxu0 %v1145
    %1165 = vmatpush.msra.mxu0 %v1144
    %1166 = vmatpush.msra.mxu0 %v1143
    %1167 = vmatpush.msra.mxu0 %v1142
    %1168 = vmatpush.msra.mxu0 %v1141
    %1169 = vmatpush.msra.mxu0 %v1140
    %1170 = vmatpush.msra.mxu0 %v1139
    %1171 = vmatpush.msra.mxu0 %v1138
    %1172 = vmatpush.msra.mxu0 %v1137
    %1173 = vmatmul.f32.gmra.mxu0 %v1136
    %v1174 = vpop.f32.mrf.mxu0
    %v1175 = vadd.f32 %v1155, %v1174
    %1176 = vdwg.mxu0
    %1177 = vst [vmem:[%s5] sm:$0xff] %v1175
    // Predicated region
    $region42: #{mlp_forward.1} parent=1 // pred_check
      _
    $region43: #{mlp_forward.1} parent=1 // pred_check_branch
      %1179 = sbr.rel (0) target = $region45
    $region44: #{mlp_forward.1} parent=1 // pred_region
      _
    $region45: #{mlp_forward.1} parent=1 // pred_fallthru
      _
    // Predicated region
    $region46: #{mlp_forward.1} parent=1 // pred_check
      _
    $region47: #{mlp_forward.1} parent=1 // pred_check_branch
      %1181 = sbr.rel (0) target = $region49
    $region48: #{mlp_forward.1} parent=1 // pred_region
      _
    $region49: #{mlp_forward.1} parent=1 // pred_fallthru
      _
    %1182 = vsyncpa [#allocation3], 1
    %1183 = vsyncpa [#allocation5], 1
    %1184 = vsyncpa [#allocation8], 1

</llo_original>
